<compile_context>
chip_gen: v5e
topology: v5e:2x2
jax: 0.10.0
libtpu: 0.0.40
codegen_flags: <defaults>
</compile_context>

<pallas_src>
import jax
import jax.numpy as jnp
from jax import lax
from jax.experimental import pallas as pl
from jax.experimental.pallas import tpu as pltpu

EPS = 1e-5
LANE = 128
BF16 = jnp.bfloat16
F32 = jnp.float32


# ----------------------------- kernel helpers -------------------------------

def _conv3_taps(x, w_ref):
    """Conv1d(kernel=3, padding=1), channels-last, per-sample halo in-block.

    x:     (B, L, Ci) bf16 value
    w_ref: VMEM ref (3, Ci, Co) bf16, w_ref[k][ci, co] == torch w[co, ci, k]
    returns (B*L, Co) f32 (MXU accumulation; three accumulated dots, no 3x concat)
    """
    B, L, Ci = x.shape
    z = jnp.zeros((B, 1, Ci), x.dtype)
    xm = jnp.concatenate([z, x[:, :-1, :]], axis=1)   # x[l-1], zero at l == 0
    xp = jnp.concatenate([x[:, 1:, :], z], axis=1)    # x[l+1], zero at l == L-1
    flat = lambda t: t.reshape(B * L, Ci)
    y = jnp.dot(flat(xm), w_ref[0], preferred_element_type=F32)
    y = y + jnp.dot(flat(x), w_ref[1], preferred_element_type=F32)
    y = y + jnp.dot(flat(xp), w_ref[2], preferred_element_type=F32)
    return y


def _partial_stats(h_flat):
    """(rows, C) f32 -> per-block (sum, sum of squares) of shape (2, C)."""
    return jnp.concatenate(
        [jnp.sum(h_flat, axis=0, keepdims=True),
         jnp.sum(h_flat * h_flat, axis=0, keepdims=True)], axis=0)


def _scale_shift(ss_ref, c):
    ss = ss_ref[...]
    return ss[0:1, :].reshape(1, 1, c), ss[1:2, :].reshape(1, 1, c)


# ------------------------------- kernels -------------------------------------

def _stage1_kernel(x_ref, w1_ref, h1_ref, ps1_ref):
    # conv1 (bias dropped: cancelled exactly by BN1's batch-mean subtraction)
    h = _conv3_taps(x_ref[...], w1_ref)                 # (B*L, Cop) f32
    ps1_ref[...] = _partial_stats(h)                    # stats on the f32 accum
    h1_ref[...] = h.reshape(h1_ref.shape).astype(BF16)  # bf16 inter-stage storage


def _stage2_kernel(h1_ref, ss1_ref, w2_ref, h2_ref, ps2_ref):
    # BN1 (pre-folded scale/shift, f32 VPU) + ReLU + conv2 (bf16 MXU) + stats
    B, L, C = h1_ref.shape
    scale, shift = _scale_shift(ss1_ref, C)
    a = jnp.maximum(h1_ref[...].astype(F32) * scale + shift, 0.0)
    h = _conv3_taps(a.astype(BF16), w2_ref)             # (B*L, Cop) f32
    ps2_ref[...] = _partial_stats(h)
    h2_ref[...] = h.reshape(h2_ref.shape).astype(BF16)


def _stage3_ds_kernel(h2_ref, ss2_ref, x_ref, wd_ref, bd_ref, o_ref):
    # BN2 + 1x1-conv downsample residual (bf16 MXU) + ReLU   (Cin != Cout)
    B, L, C = h2_ref.shape
    scale, shift = _scale_shift(ss2_ref, C)
    h = h2_ref[...].astype(F32) * scale + shift
    Bx, Lx, Ci = x_ref.shape
    ident = jnp.dot(x_ref[...].reshape(Bx * Lx, Ci), wd_ref[...],
                    preferred_element_type=F32).reshape(B, L, C)
    ident = ident + bd_ref[...].reshape(1, 1, C)
    o_ref[...] = jnp.maximum(h + ident, 0.0)


def _stage3_id_kernel(h2_ref, ss2_ref, x_ref, o_ref):
    # BN2 + identity residual + ReLU   (Cin == Cout: no downsample matmul)
    B, L, C = h2_ref.shape
    scale, shift = _scale_shift(ss2_ref, C)
    h = h2_ref[...].astype(F32) * scale + shift
    o_ref[...] = jnp.maximum(h + x_ref[...].astype(F32), 0.0)


# ------------------------------- wrapper --------------------------------------

def _round_up(n, m):
    return ((n + m - 1) // m) * m


def _pick_batch_block(N, L, target_rows=512):
    """Largest divisor b of N with b*L <= target_rows, kept small enough that the
    grid has >= 2 steps when N allows (v7x megacore / pipeline overlap)."""
    best = 1
    for b in range(1, N + 1):
        if N % b == 0 and b * L <= target_rows:
            best = b
    while best > 1 and N // best < 2:
        best = max(d for d in range(1, best) if N % d == 0)
    return best


def _vmem_limit_bytes(B, L, Cip, Cop):
    """Derive the scoped-VMEM limit from the per-step footprint.  Capped at the
    v7x 64 MiB ceiling; on v5e/v6e this can be raised toward ~100 MiB to take
    larger blocks."""
    blk_in = B * L * Cip * 2                  # bf16 x / h1 / h2 input block
    blk_act = B * L * Cop * 2                 # bf16 activation block
    blk_out = B * L * Cop * 4                 # f32 stage-3 output block
    w_max = 3 * max(Cip, Cop) * Cop * 2       # bf16 stacked weights (double-buffered too)
    need = 2 * (blk_in + 2 * blk_act + blk_out + w_max)   # pipeline double-buffering
    need += 6 * B * L * max(Cip, Cop) * 4                 # in-kernel f32 scratch (shifts, acc)
    return int(max(32 << 20, min(2 * need, 64 << 20)))


def _bn_scale_shift(partial_stats, gamma, beta, count):
    """Host-side fold of training-mode BN into (scale, shift), shape (2, C)."""
    s = jnp.sum(partial_stats, axis=0)                    # (2, C)
    mean = s[0] / count
    var = jnp.maximum(s[1] / count - mean * mean, 0.0)    # biased variance, clamped
    scale = gamma * lax.rsqrt(var + EPS)
    shift = beta - mean * scale
    return jnp.stack([scale, shift], axis=0)              # (2, C) f32


def residual_block(x_ncl, p):
    """x_ncl: (N, Cin, L) float32; p: dict of PyTorch-convention parameters."""
    N, Cin, L = x_ncl.shape
    Cout = p["w1"].shape[0]
    Cip = _round_up(Cin, LANE)
    Cop = _round_up(Cout, LANE)
    nl = float(N * L)

    Bb = _pick_batch_block(N, L)
    NB = N // Bb

    # Host-side layout plumbing (fused by XLA under jit): NCL -> NLC, lane-pad
    # channels, bf16 for MXU LHS / residual.
    # TODO(synk): fold this transpose+pad into stage 1 (and the final
    # slice+transpose into stage 3) via an in-kernel XLU transpose to save the
    # extra HBM round trips; also consider an L-tile grid axis (with a 1-row
    # halo) for very long sequences.
    x = jnp.transpose(x_ncl, (0, 2, 1)).astype(BF16)
    x = jnp.pad(x, ((0, 0), (0, 0), (0, Cip - Cin)))

    def stack_w3(w, cin_p, cout_p):
        # torch (Co, Ci, 3) -> (3, cin_p, cout_p) bf16; tap k multiplies x[l+k-1]
        wt = jnp.transpose(w, (2, 1, 0))
        wt = jnp.pad(wt, ((0, 0), (0, cin_p - w.shape[1]), (0, cout_p - w.shape[0])))
        return wt.astype(BF16)

    def pad_vec(v, cp):
        return jnp.pad(v.astype(F32), (0, cp - v.shape[0]))

    w1s = stack_w3(p["w1"], Cip, Cop)
    w2s = stack_w3(p["w2"], Cop, Cop)
    g1, be1 = pad_vec(p["g1"], Cop), pad_vec(p["be1"], Cop)
    g2, be2 = pad_vec(p["g2"], Cop), pad_vec(p["be2"], Cop)
    # NOTE: conv biases p["b1"], p["b2"] intentionally unused: training-mode
    # BatchNorm subtracts the batch mean, which cancels a per-channel bias exactly.

    cparams = pltpu.CompilerParams(
        dimension_semantics=("parallel",),        # all steps independent; megacore OK
        vmem_limit_bytes=_vmem_limit_bytes(Bb, L, Cip, Cop))

    xin_spec = pl.BlockSpec((Bb, L, Cip), lambda i: (i, 0, 0))
    act_spec = pl.BlockSpec((Bb, L, Cop), lambda i: (i, 0, 0))
    stat_spec = pl.BlockSpec((None, 2, Cop), lambda i: (i, 0, 0))
    full = lambda shape: pl.BlockSpec(shape, lambda i: (0,) * len(shape))

    # ---- stage 1: conv1 (bf16 MXU) + per-block partial BN1 stats ----------------
    h1, ps1 = pl.pallas_call(
        _stage1_kernel,
        grid=(NB,),
        in_specs=[xin_spec, full((3, Cip, Cop))],
        out_specs=(act_spec, stat_spec),
        out_shape=(jax.ShapeDtypeStruct((N, L, Cop), BF16),
                   jax.ShapeDtypeStruct((NB, 2, Cop), F32)),
        compiler_params=cparams,
    )(x, w1s)
    ss1 = _bn_scale_shift(ps1, g1, be1, nl)

    # ---- stage 2: BN1 + ReLU + conv2 (bf16 MXU) + partial BN2 stats --------------
    h2, ps2 = pl.pallas_call(
        _stage2_kernel,
        grid=(NB,),
        in_specs=[act_spec, full((2, Cop)), full((3, Cop, Cop))],
        out_specs=(act_spec, stat_spec),
        out_shape=(jax.ShapeDtypeStruct((N, L, Cop), BF16),
                   jax.ShapeDtypeStruct((NB, 2, Cop), F32)),
        compiler_params=cparams,
    )(h1, ss1, w2s)
    ss2 = _bn_scale_shift(ps2, g2, be2, nl)

    # ---- stage 3: BN2 + residual + ReLU -------------------------------------------
    if p.get("wd") is not None:
        wd = jnp.pad(jnp.transpose(p["wd"][:, :, 0], (1, 0)),
                     ((0, Cip - Cin), (0, Cop - Cout))).astype(BF16)
        bd = pad_vec(p["bd"], Cop).reshape(1, Cop)
        out = pl.pallas_call(
            _stage3_ds_kernel,
            grid=(NB,),
            in_specs=[act_spec, full((2, Cop)), xin_spec,
                      full((Cip, Cop)), full((1, Cop))],
            out_specs=act_spec,
            out_shape=jax.ShapeDtypeStruct((N, L, Cop), F32),
            compiler_params=cparams,
        )(h2, ss2, x, wd, bd)
    else:
        # Cin == Cout: pure identity residual, no 1x1 matmul.
        out = pl.pallas_call(
            _stage3_id_kernel,
            grid=(NB,),
            in_specs=[act_spec, full((2, Cop)), xin_spec],
            out_specs=act_spec,
            out_shape=jax.ShapeDtypeStruct((N, L, Cop), F32),
            compiler_params=cparams,
        )(h2, ss2, x)

    return jnp.transpose(out[:, :, :Cout], (0, 2, 1))    # back to (N, Cout, L)


# ------------------------- pure-JAX reference (NCL, f32) ----------------------

def _conv1d_ref(x, w, b, pad):
    y = lax.conv_general_dilated(x, w, (1,), [(pad, pad)],
                                 dimension_numbers=("NCH", "OIH", "NCH"))
    return y + b[None, :, None]


def _bn_ref(y, g, b):
    mean = jnp.mean(y, axis=(0, 2), keepdims=True)
    var = jnp.mean((y - mean) ** 2, axis=(0, 2), keepdims=True)
    return (y - mean) / jnp.sqrt(var + EPS) * g[None, :, None] + b[None, :, None]


def residual_block_ref(x, p):
    h = jnp.maximum(_bn_ref(_conv1d_ref(x, p["w1"], p["b1"], 1), p["g1"], p["be1"]), 0.0)
    h = _bn_ref(_conv1d_ref(h, p["w2"], p["b2"], 1), p["g2"], p["be2"])
    ident = _conv1d_ref(x, p["wd"], p["bd"], 0) if p["wd"] is not None else x
    return jnp.maximum(h + ident, 0.0)


# --------------------------------- main ----------------------------------------

def _make_params(key, cin, cout, with_downsample):
    ks = jax.random.split(key, 10)
    p = {
        "w1":  0.2 * jax.random.normal(ks[0], (cout, cin, 3), jnp.float32),
        "b1":  0.1 * jax.random.normal(ks[1], (cout,), jnp.float32),
        "g1":  1.0 + 0.1 * jax.random.normal(ks[2], (cout,), jnp.float32),
        "be1": 0.1 * jax.random.normal(ks[3], (cout,), jnp.float32),
        "w2":  0.2 * jax.random.normal(ks[4], (cout, cout, 3), jnp.float32),
        "b2":  0.1 * jax.random.normal(ks[5], (cout,), jnp.float32),
        "g2":  1.0 + 0.1 * jax.random.normal(ks[6], (cout,), jnp.float32),
        "be2": 0.1 * jax.random.normal(ks[7], (cout,), jnp.float32),
        "wd":  None,
        "bd":  None,
    }
    if with_downsample:
        p["wd"] = 0.2 * jax.random.normal(ks[8], (cout, cin, 1), jnp.float32)
        p["bd"] = 0.1 * jax.random.normal(ks[9], (cout,), jnp.float32)
    return p


if __name__ == "__main__":
    key = jax.random.PRNGKey(0)
    k_p1, k_x1, k_p2, k_x2 = jax.random.split(key, 4)
    run = jax.jit(residual_block)
    # Tolerance accounts for bf16 MXU operands / bf16 inter-stage storage vs the
    # f32 reference (f32 accumulation keeps the error well inside this bound).
    TOL = 3e-2

    # Case 1: Cin != Cout -> downsample (1x1 conv) residual path.
    N, Cin, Cout, L = 2, 4, 8, 16
    params = _make_params(k_p1, Cin, Cout, with_downsample=True)
    x = jax.random.normal(k_x1, (N, Cin, L), jnp.float32)      # PyTorch NCL layout
    out = jax.block_until_ready(run(x, params))
    ref = jax.block_until_ready(residual_block_ref(x, params))
    assert out.shape == (N, Cout, L), out.shape
    err = float(jnp.max(jnp.abs(out - ref)))
    assert jnp.allclose(out, ref, atol=TOL, rtol=TOL), f"downsample path max err {err}"

    # Case 2: Cin == Cout -> identity residual path (no downsample matmul).
    C = 8
    params2 = _make_params(k_p2, C, C, with_downsample=False)
    x2 = jax.random.normal(k_x2, (N, C, L), jnp.float32)
    out2 = jax.block_until_ready(run(x2, params2))
    ref2 = jax.block_until_ready(residual_block_ref(x2, params2))
    assert out2.shape == (N, C, L), out2.shape
    err2 = float(jnp.max(jnp.abs(out2 - ref2)))
    assert jnp.allclose(out2, ref2, atol=TOL, rtol=TOL), f"identity path max err {err2}"

    print("KERNEL_OK")
</pallas_src>

<mosaic_0001>
module attributes {stable_mosaic.version = 11 : i64} {
  func.func @_stage3_ds_kernel(%arg0: i32, %arg1: memref<1x16x128xbf16, #tpu.memory_space<vmem>>, %arg2: memref<2x128xf32, #tpu.memory_space<vmem>>, %arg3: memref<1x16x128xbf16, #tpu.memory_space<vmem>>, %arg4: memref<128x128xbf16, #tpu.memory_space<vmem>>, %arg5: memref<1x128xf32, #tpu.memory_space<vmem>>, %arg6: memref<1x16x128xf32, #tpu.memory_space<vmem>>) attributes {dimension_semantics = [#tpu.dimension_semantics<parallel>], iteration_bounds = array<i64: 2>, scalar_prefetch = 0 : i64, scratch_operands = 0 : i64, tpu.core_type = #tpu.core_type<tc>, window_params = [{transform_indices = @transform_0, window_bounds = array<i64: 1, 16, 128>}, {pipeline_mode = #tpu.pipeline_mode<synchronous>, transform_indices = @transform_1, window_bounds = array<i64: 2, 128>}, {transform_indices = @transform_2, window_bounds = array<i64: 1, 16, 128>}, {pipeline_mode = #tpu.pipeline_mode<synchronous>, transform_indices = @transform_3, window_bounds = array<i64: 128, 128>}, {pipeline_mode = #tpu.pipeline_mode<synchronous>, transform_indices = @transform_4, window_bounds = array<i64: 1, 128>}, {transform_indices = @transform_5, window_bounds = array<i64: 1, 16, 128>}]} {
    %c0 = arith.constant 0 : index
    %c0_0 = arith.constant 0 : index
    %0 = vector.load %arg2[%c0, %c0_0] : memref<2x128xf32, #tpu.memory_space<vmem>>, vector<2x128xf32>
    %1 = vector.extract_strided_slice %0 {offsets = [0, 0], sizes = [1, 128], strides = [1, 1]} : vector<2x128xf32> to vector<1x128xf32>
    %2 = vector.shape_cast %1 : vector<1x128xf32> to vector<1x1x128xf32>
    %3 = vector.extract_strided_slice %0 {offsets = [1, 0], sizes = [1, 128], strides = [1, 1]} : vector<2x128xf32> to vector<1x128xf32>
    %4 = vector.shape_cast %3 : vector<1x128xf32> to vector<1x1x128xf32>
    %c0_1 = arith.constant 0 : index
    %c0_2 = arith.constant 0 : index
    %c0_3 = arith.constant 0 : index
    %5 = vector.load %arg1[%c0_1, %c0_2, %c0_3] : memref<1x16x128xbf16, #tpu.memory_space<vmem>>, vector<1x16x128xbf16>
    %6 = arith.extf %5 : vector<1x16x128xbf16> to vector<1x16x128xf32>
    %7 = vector.broadcast %2 : vector<1x1x128xf32> to vector<1x16x128xf32>
    %8 = arith.mulf %6, %7 : vector<1x16x128xf32>
    %9 = vector.broadcast %4 : vector<1x1x128xf32> to vector<1x16x128xf32>
    %10 = arith.addf %8, %9 : vector<1x16x128xf32>
    %c0_4 = arith.constant 0 : index
    %c0_5 = arith.constant 0 : index
    %c0_6 = arith.constant 0 : index
    %11 = vector.load %arg3[%c0_4, %c0_5, %c0_6] : memref<1x16x128xbf16, #tpu.memory_space<vmem>>, vector<1x16x128xbf16>
    %12 = vector.shape_cast %11 : vector<1x16x128xbf16> to vector<16x128xbf16>
    %c0_7 = arith.constant 0 : index
    %c0_8 = arith.constant 0 : index
    %13 = vector.load %arg4[%c0_7, %c0_8] : memref<128x128xbf16, #tpu.memory_space<vmem>>, vector<128x128xbf16>
    %cst = arith.constant dense<0.000000e+00> : vector<16x128xf32>
    %14 = tpu.matmul %12, %13, %cst {dimension_numbers = #tpu.dot_dimension_numbers<[1], [0], [0], [1], [0, 0, 1, 1], [], []>} : vector<16x128xbf16>, vector<128x128xbf16>, vector<16x128xf32> -> vector<16x128xf32>
    %15 = vector.shape_cast %14 : vector<16x128xf32> to vector<1x16x128xf32>
    %c0_9 = arith.constant 0 : index
    %c0_10 = arith.constant 0 : index
    %16 = vector.load %arg5[%c0_9, %c0_10] : memref<1x128xf32, #tpu.memory_space<vmem>>, vector<1x128xf32>
    %17 = vector.shape_cast %16 : vector<1x128xf32> to vector<1x1x128xf32>
    %18 = vector.broadcast %17 : vector<1x1x128xf32> to vector<1x16x128xf32>
    %19 = arith.addf %15, %18 : vector<1x16x128xf32>
    %20 = arith.addf %10, %19 : vector<1x16x128xf32>
    %cst_11 = arith.constant 0.000000e+00 : f32
    %21 = vector.broadcast %cst_11 : f32 to vector<1x16x128xf32>
    %22 = arith.maximumf %20, %21 : vector<1x16x128xf32>
    %c0_12 = arith.constant 0 : index
    %c0_13 = arith.constant 0 : index
    %c0_14 = arith.constant 0 : index
    %23 = vector.load %arg6[%c0_12, %c0_13, %c0_14] : memref<1x16x128xf32, #tpu.memory_space<vmem>>, vector<1x16x128xf32>
    tpu.vector_store %arg6[%c0_12, %c0_13, %c0_14], %22 {strides = array<i32>} : memref<1x16x128xf32, #tpu.memory_space<vmem>>, vector<1x16x128xf32>,
    return
  }
  func.func @transform_0(%arg0: i32) -> (i32, i32, i32) {
    %c0_i32 = arith.constant 0 : i32
    %c0_i32_0 = arith.constant 0 : i32
    %c0_i32_1 = arith.constant 0 : i32
    return %arg0, %c0_i32, %c0_i32_0 : i32, i32, i32
  }
  func.func @transform_1(%arg0: i32) -> (i32, i32) {
    %c0_i32 = arith.constant 0 : i32
    %c0_i32_0 = arith.constant 0 : i32
    %c0_i32_1 = arith.constant 0 : i32
    return %c0_i32, %c0_i32_0 : i32, i32
  }
  func.func @transform_2(%arg0: i32) -> (i32, i32, i32) {
    %c0_i32 = arith.constant 0 : i32
    %c0_i32_0 = arith.constant 0 : i32
    %c0_i32_1 = arith.constant 0 : i32
    return %arg0, %c0_i32, %c0_i32_0 : i32, i32, i32
  }
  func.func @transform_3(%arg0: i32) -> (i32, i32) {
    %c0_i32 = arith.constant 0 : i32
    %c0_i32_0 = arith.constant 0 : i32
    %c0_i32_1 = arith.constant 0 : i32
    return %c0_i32, %c0_i32_0 : i32, i32
  }
  func.func @transform_4(%arg0: i32) -> (i32, i32) {
    %c0_i32 = arith.constant 0 : i32
    %c0_i32_0 = arith.constant 0 : i32
    %c0_i32_1 = arith.constant 0 : i32
    return %c0_i32, %c0_i32_0 : i32, i32
  }
  func.func @transform_5(%arg0: i32) -> (i32, i32, i32) {
    %c0_i32 = arith.constant 0 : i32
    %c0_i32_0 = arith.constant 0 : i32
    %c0_i32_1 = arith.constant 0 : i32
    return %arg0, %c0_i32, %c0_i32_0 : i32, i32, i32
  }
}

module attributes {stable_mosaic.version = 11 : i64} {
  func.func @_stage1_kernel(%arg0: i32, %arg1: memref<1x16x128xbf16, #tpu.memory_space<vmem>>, %arg2: memref<3x128x128xbf16, #tpu.memory_space<vmem>>, %arg3: memref<1x16x128xbf16, #tpu.memory_space<vmem>>, %arg4: memref<1x2x128xf32, #tpu.memory_space<vmem>>) attributes {dimension_semantics = [#tpu.dimension_semantics<parallel>], iteration_bounds = array<i64: 2>, scalar_prefetch = 0 : i64, scratch_operands = 0 : i64, tpu.core_type = #tpu.core_type<tc>, window_params = [{transform_indices = @transform_0, window_bounds = array<i64: 1, 16, 128>}, {pipeline_mode = #tpu.pipeline_mode<synchronous>, transform_indices = @transform_1, window_bounds = array<i64: 3, 128, 128>}, {transform_indices = @transform_2, window_bounds = array<i64: 1, 16, 128>}, {transform_indices = @transform_3, window_bounds = array<i64: 1, 2, 128>}]} {
    %c0 = arith.constant 0 : index
    %c0_0 = arith.constant 0 : index
    %c0_1 = arith.constant 0 : index
    %0 = vector.load %arg1[%c0, %c0_0, %c0_1] : memref<1x16x128xbf16, #tpu.memory_space<vmem>>, vector<1x16x128xbf16>
    %cst = arith.constant 0.000000e+00 : bf16
    %1 = vector.broadcast %cst : bf16 to vector<1x1x128xbf16>
    %2 = vector.extract_strided_slice %0 {offsets = [0, 0, 0], sizes = [1, 15, 128], strides = [1, 1, 1]} : vector<1x16x128xbf16> to vector<1x15x128xbf16>
    %3 = tpu.concatenate %1, %2 in 1 : vector<1x1x128xbf16>, vector<1x15x128xbf16> -> vector<1x16x128xbf16>
    %4 = vector.extract_strided_slice %0 {offsets = [0, 1, 0], sizes = [1, 15, 128], strides = [1, 1, 1]} : vector<1x16x128xbf16> to vector<1x15x128xbf16>
    %5 = tpu.concatenate %4, %1 in 1 : vector<1x15x128xbf16>, vector<1x1x128xbf16> -> vector<1x16x128xbf16>
    %6 = vector.shape_cast %3 : vector<1x16x128xbf16> to vector<16x128xbf16>
    %c0_2 = arith.constant 0 : index
    %c0_3 = arith.constant 0 : index
    %c0_4 = arith.constant 0 : index
    %7 = vector.load %arg2[%c0_2, %c0_3, %c0_4] : memref<3x128x128xbf16, #tpu.memory_space<vmem>>, vector<1x128x128xbf16>
    %8 = vector.shape_cast %7 : vector<1x128x128xbf16> to vector<128x128xbf16>
    %cst_5 = arith.constant dense<0.000000e+00> : vector<16x128xf32>
    %9 = tpu.matmul %6, %8, %cst_5 {dimension_numbers = #tpu.dot_dimension_numbers<[1], [0], [0], [1], [0, 0, 1, 1], [], []>} : vector<16x128xbf16>, vector<128x128xbf16>, vector<16x128xf32> -> vector<16x128xf32>
    %10 = vector.shape_cast %0 : vector<1x16x128xbf16> to vector<16x128xbf16>
    %c1 = arith.constant 1 : index
    %c0_6 = arith.constant 0 : index
    %c0_7 = arith.constant 0 : index
    %11 = vector.load %arg2[%c1, %c0_6, %c0_7] : memref<3x128x128xbf16, #tpu.memory_space<vmem>>, vector<1x128x128xbf16>
    %12 = vector.shape_cast %11 : vector<1x128x128xbf16> to vector<128x128xbf16>
    %cst_8 = arith.constant dense<0.000000e+00> : vector<16x128xf32>
    %13 = tpu.matmul %10, %12, %cst_8 {dimension_numbers = #tpu.dot_dimension_numbers<[1], [0], [0], [1], [0, 0, 1, 1], [], []>} : vector<16x128xbf16>, vector<128x128xbf16>, vector<16x128xf32> -> vector<16x128xf32>
    %14 = arith.addf %9, %13 : vector<16x128xf32>
    %15 = vector.shape_cast %5 : vector<1x16x128xbf16> to vector<16x128xbf16>
    %c2 = arith.constant 2 : index
    %c0_9 = arith.constant 0 : index
    %c0_10 = arith.constant 0 : index
    %16 = vector.load %arg2[%c2, %c0_9, %c0_10] : memref<3x128x128xbf16, #tpu.memory_space<vmem>>, vector<1x128x128xbf16>
    %17 = vector.shape_cast %16 : vector<1x128x128xbf16> to vector<128x128xbf16>
    %cst_11 = arith.constant dense<0.000000e+00> : vector<16x128xf32>
    %18 = tpu.matmul %15, %17, %cst_11 {dimension_numbers = #tpu.dot_dimension_numbers<[1], [0], [0], [1], [0, 0, 1, 1], [], []>} : vector<16x128xbf16>, vector<128x128xbf16>, vector<16x128xf32> -> vector<16x128xf32>
    %19 = arith.addf %14, %18 : vector<16x128xf32>
    %cst_12 = arith.constant dense<0.000000e+00> : vector<128xf32>
    %20 = vector.multi_reduction <add>, %19, %cst_12 [0] : vector<16x128xf32> to vector<128xf32>
    %21 = vector.shape_cast %20 : vector<128xf32> to vector<1x128xf32>
    %22 = arith.mulf %19, %19 : vector<16x128xf32>
    %cst_13 = arith.constant dense<0.000000e+00> : vector<128xf32>
    %23 = vector.multi_reduction <add>, %22, %cst_13 [0] : vector<16x128xf32> to vector<128xf32>
    %24 = vector.shape_cast %23 : vector<128xf32> to vector<1x128xf32>
    %25 = tpu.concatenate %21, %24 in 0 : vector<1x128xf32>, vector<1x128xf32> -> vector<2x128xf32>
    %c0_14 = arith.constant 0 : index
    %c0_15 = arith.constant 0 : index
    %c0_16 = arith.constant 0 : index
    %26 = vector.load %arg4[%c0_14, %c0_15, %c0_16] : memref<1x2x128xf32, #tpu.memory_space<vmem>>, vector<1x2x128xf32>
    %27 = vector.shape_cast %26 : vector<1x2x128xf32> to vector<2x128xf32>
    %28 = vector.shape_cast %25 : vector<2x128xf32> to vector<1x2x128xf32>
    tpu.vector_store %arg4[%c0_14, %c0_15, %c0_16], %28 {strides = array<i32>} : memref<1x2x128xf32, #tpu.memory_space<vmem>>, vector<1x2x128xf32>,
    %29 = vector.shape_cast %19 : vector<16x128xf32> to vector<1x16x128xf32>
    %30 = arith.truncf %29 : vector<1x16x128xf32> to vector<1x16x128xbf16>
    %c0_17 = arith.constant 0 : index
    %c0_18 = arith.constant 0 : index
    %c0_19 = arith.constant 0 : index
    %31 = vector.load %arg3[%c0_17, %c0_18, %c0_19] : memref<1x16x128xbf16, #tpu.memory_space<vmem>>, vector<1x16x128xbf16>
    tpu.vector_store %arg3[%c0_17, %c0_18, %c0_19], %30 {strides = array<i32>} : memref<1x16x128xbf16, #tpu.memory_space<vmem>>, vector<1x16x128xbf16>,
    return
  }
  func.func @transform_0(%arg0: i32) -> (i32, i32, i32) {
    %c0_i32 = arith.constant 0 : i32
    %c0_i32_0 = arith.constant 0 : i32
    %c0_i32_1 = arith.constant 0 : i32
    return %arg0, %c0_i32, %c0_i32_0 : i32, i32, i32
  }
  func.func @transform_1(%arg0: i32) -> (i32, i32, i32) {
    %c0_i32 = arith.constant 0 : i32
    %c0_i32_0 = arith.constant 0 : i32
    %c0_i32_1 = arith.constant 0 : i32
    %c0_i32_2 = arith.constant 0 : i32
    return %c0_i32, %c0_i32_0, %c0_i32_1 : i32, i32, i32
  }
  func.func @transform_2(%arg0: i32) -> (i32, i32, i32) {
    %c0_i32 = arith.constant 0 : i32
    %c0_i32_0 = arith.constant 0 : i32
    %c0_i32_1 = arith.constant 0 : i32
    return %arg0, %c0_i32, %c0_i32_0 : i32, i32, i32
  }
  func.func @transform_3(%arg0: i32) -> (i32, i32, i32) {
    %c0_i32 = arith.constant 0 : i32
    %c0_i32_0 = arith.constant 0 : i32
    %c0_i32_1 = arith.constant 0 : i32
    return %arg0, %c0_i32, %c0_i32_0 : i32, i32, i32
  }
}

module attributes {stable_mosaic.version = 11 : i64} {
  func.func @_stage2_kernel(%arg0: i32, %arg1: memref<1x16x128xbf16, #tpu.memory_space<vmem>>, %arg2: memref<2x128xf32, #tpu.memory_space<vmem>>, %arg3: memref<3x128x128xbf16, #tpu.memory_space<vmem>>, %arg4: memref<1x16x128xbf16, #tpu.memory_space<vmem>>, %arg5: memref<1x2x128xf32, #tpu.memory_space<vmem>>) attributes {dimension_semantics = [#tpu.dimension_semantics<parallel>], iteration_bounds = array<i64: 2>, scalar_prefetch = 0 : i64, scratch_operands = 0 : i64, tpu.core_type = #tpu.core_type<tc>, window_params = [{transform_indices = @transform_0, window_bounds = array<i64: 1, 16, 128>}, {pipeline_mode = #tpu.pipeline_mode<synchronous>, transform_indices = @transform_1, window_bounds = array<i64: 2, 128>}, {pipeline_mode = #tpu.pipeline_mode<synchronous>, transform_indices = @transform_2, window_bounds = array<i64: 3, 128, 128>}, {transform_indices = @transform_3, window_bounds = array<i64: 1, 16, 128>}, {transform_indices = @transform_4, window_bounds = array<i64: 1, 2, 128>}]} {
    %c0 = arith.constant 0 : index
    %c0_0 = arith.constant 0 : index
    %0 = vector.load %arg2[%c0, %c0_0] : memref<2x128xf32, #tpu.memory_space<vmem>>, vector<2x128xf32>
    %1 = vector.extract_strided_slice %0 {offsets = [0, 0], sizes = [1, 128], strides = [1, 1]} : vector<2x128xf32> to vector<1x128xf32>
    %2 = vector.shape_cast %1 : vector<1x128xf32> to vector<1x1x128xf32>
    %3 = vector.extract_strided_slice %0 {offsets = [1, 0], sizes = [1, 128], strides = [1, 1]} : vector<2x128xf32> to vector<1x128xf32>
    %4 = vector.shape_cast %3 : vector<1x128xf32> to vector<1x1x128xf32>
    %c0_1 = arith.constant 0 : index
    %c0_2 = arith.constant 0 : index
    %c0_3 = arith.constant 0 : index
    %5 = vector.load %arg1[%c0_1, %c0_2, %c0_3] : memref<1x16x128xbf16, #tpu.memory_space<vmem>>, vector<1x16x128xbf16>
    %6 = arith.extf %5 : vector<1x16x128xbf16> to vector<1x16x128xf32>
    %7 = vector.broadcast %2 : vector<1x1x128xf32> to vector<1x16x128xf32>
    %8 = arith.mulf %6, %7 : vector<1x16x128xf32>
    %9 = vector.broadcast %4 : vector<1x1x128xf32> to vector<1x16x128xf32>
    %10 = arith.addf %8, %9 : vector<1x16x128xf32>
    %cst = arith.constant 0.000000e+00 : f32
    %11 = vector.broadcast %cst : f32 to vector<1x16x128xf32>
    %12 = arith.maximumf %10, %11 : vector<1x16x128xf32>
    %13 = arith.truncf %12 : vector<1x16x128xf32> to vector<1x16x128xbf16>
    %cst_4 = arith.constant 0.000000e+00 : bf16
    %14 = vector.broadcast %cst_4 : bf16 to vector<1x1x128xbf16>
    %15 = vector.extract_strided_slice %13 {offsets = [0, 0, 0], sizes = [1, 15, 128], strides = [1, 1, 1]} : vector<1x16x128xbf16> to vector<1x15x128xbf16>
    %16 = tpu.concatenate %14, %15 in 1 : vector<1x1x128xbf16>, vector<1x15x128xbf16> -> vector<1x16x128xbf16>
    %17 = vector.extract_strided_slice %13 {offsets = [0, 1, 0], sizes = [1, 15, 128], strides = [1, 1, 1]} : vector<1x16x128xbf16> to vector<1x15x128xbf16>
    %18 = tpu.concatenate %17, %14 in 1 : vector<1x15x128xbf16>, vector<1x1x128xbf16> -> vector<1x16x128xbf16>
    %19 = vector.shape_cast %16 : vector<1x16x128xbf16> to vector<16x128xbf16>
    %c0_5 = arith.constant 0 : index
    %c0_6 = arith.constant 0 : index
    %c0_7 = arith.constant 0 : index
    %20 = vector.load %arg3[%c0_5, %c0_6, %c0_7] : memref<3x128x128xbf16, #tpu.memory_space<vmem>>, vector<1x128x128xbf16>
    %21 = vector.shape_cast %20 : vector<1x128x128xbf16> to vector<128x128xbf16>
    %cst_8 = arith.constant dense<0.000000e+00> : vector<16x128xf32>
    %22 = tpu.matmul %19, %21, %cst_8 {dimension_numbers = #tpu.dot_dimension_numbers<[1], [0], [0], [1], [0, 0, 1, 1], [], []>} : vector<16x128xbf16>, vector<128x128xbf16>, vector<16x128xf32> -> vector<16x128xf32>
    %23 = vector.shape_cast %13 : vector<1x16x128xbf16> to vector<16x128xbf16>
    %c1 = arith.constant 1 : index
    %c0_9 = arith.constant 0 : index
    %c0_10 = arith.constant 0 : index
    %24 = vector.load %arg3[%c1, %c0_9, %c0_10] : memref<3x128x128xbf16, #tpu.memory_space<vmem>>, vector<1x128x128xbf16>
    %25 = vector.shape_cast %24 : vector<1x128x128xbf16> to vector<128x128xbf16>
    %cst_11 = arith.constant dense<0.000000e+00> : vector<16x128xf32>
    %26 = tpu.matmul %23, %25, %cst_11 {dimension_numbers = #tpu.dot_dimension_numbers<[1], [0], [0], [1], [0, 0, 1, 1], [], []>} : vector<16x128xbf16>, vector<128x128xbf16>, vector<16x128xf32> -> vector<16x128xf32>
    %27 = arith.addf %22, %26 : vector<16x128xf32>
    %28 = vector.shape_cast %18 : vector<1x16x128xbf16> to vector<16x128xbf16>
    %c2 = arith.constant 2 : index
    %c0_12 = arith.constant 0 : index
    %c0_13 = arith.constant 0 : index
    %29 = vector.load %arg3[%c2, %c0_12, %c0_13] : memref<3x128x128xbf16, #tpu.memory_space<vmem>>, vector<1x128x128xbf16>
    %30 = vector.shape_cast %29 : vector<1x128x128xbf16> to vector<128x128xbf16>
    %cst_14 = arith.constant dense<0.000000e+00> : vector<16x128xf32>
    %31 = tpu.matmul %28, %30, %cst_14 {dimension_numbers = #tpu.dot_dimension_numbers<[1], [0], [0], [1], [0, 0, 1, 1], [], []>} : vector<16x128xbf16>, vector<128x128xbf16>, vector<16x128xf32> -> vector<16x128xf32>
    %32 = arith.addf %27, %31 : vector<16x128xf32>
    %cst_15 = arith.constant dense<0.000000e+00> : vector<128xf32>
    %33 = vector.multi_reduction <add>, %32, %cst_15 [0] : vector<16x128xf32> to vector<128xf32>
    %34 = vector.shape_cast %33 : vector<128xf32> to vector<1x128xf32>
    %35 = arith.mulf %32, %32 : vector<16x128xf32>
    %cst_16 = arith.constant dense<0.000000e+00> : vector<128xf32>
    %36 = vector.multi_reduction <add>, %35, %cst_16 [0] : vector<16x128xf32> to vector<128xf32>
    %37 = vector.shape_cast %36 : vector<128xf32> to vector<1x128xf32>
    %38 = tpu.concatenate %34, %37 in 0 : vector<1x128xf32>, vector<1x128xf32> -> vector<2x128xf32>
    %c0_17 = arith.constant 0 : index
    %c0_18 = arith.constant 0 : index
    %c0_19 = arith.constant 0 : index
    %39 = vector.load %arg5[%c0_17, %c0_18, %c0_19] : memref<1x2x128xf32, #tpu.memory_space<vmem>>, vector<1x2x128xf32>
    %40 = vector.shape_cast %39 : vector<1x2x128xf32> to vector<2x128xf32>
    %41 = vector.shape_cast %38 : vector<2x128xf32> to vector<1x2x128xf32>
    tpu.vector_store %arg5[%c0_17, %c0_18, %c0_19], %41 {strides = array<i32>} : memref<1x2x128xf32, #tpu.memory_space<vmem>>, vector<1x2x128xf32>,
    %42 = vector.shape_cast %32 : vector<16x128xf32> to vector<1x16x128xf32>
    %43 = arith.truncf %42 : vector<1x16x128xf32> to vector<1x16x128xbf16>
    %c0_20 = arith.constant 0 : index
    %c0_21 = arith.constant 0 : index
    %c0_22 = arith.constant 0 : index
    %44 = vector.load %arg4[%c0_20, %c0_21, %c0_22] : memref<1x16x128xbf16, #tpu.memory_space<vmem>>, vector<1x16x128xbf16>
    tpu.vector_store %arg4[%c0_20, %c0_21, %c0_22], %43 {strides = array<i32>} : memref<1x16x128xbf16, #tpu.memory_space<vmem>>, vector<1x16x128xbf16>,
    return
  }
  func.func @transform_0(%arg0: i32) -> (i32, i32, i32) {
    %c0_i32 = arith.constant 0 : i32
    %c0_i32_0 = arith.constant 0 : i32
    %c0_i32_1 = arith.constant 0 : i32
    return %arg0, %c0_i32, %c0_i32_0 : i32, i32, i32
  }
  func.func @transform_1(%arg0: i32) -> (i32, i32) {
    %c0_i32 = arith.constant 0 : i32
    %c0_i32_0 = arith.constant 0 : i32
    %c0_i32_1 = arith.constant 0 : i32
    return %c0_i32, %c0_i32_0 : i32, i32
  }
  func.func @transform_2(%arg0: i32) -> (i32, i32, i32) {
    %c0_i32 = arith.constant 0 : i32
    %c0_i32_0 = arith.constant 0 : i32
    %c0_i32_1 = arith.constant 0 : i32
    %c0_i32_2 = arith.constant 0 : i32
    return %c0_i32, %c0_i32_0, %c0_i32_1 : i32, i32, i32
  }
  func.func @transform_3(%arg0: i32) -> (i32, i32, i32) {
    %c0_i32 = arith.constant 0 : i32
    %c0_i32_0 = arith.constant 0 : i32
    %c0_i32_1 = arith.constant 0 : i32
    return %arg0, %c0_i32, %c0_i32_0 : i32, i32, i32
  }
  func.func @transform_4(%arg0: i32) -> (i32, i32, i32) {
    %c0_i32 = arith.constant 0 : i32
    %c0_i32_0 = arith.constant 0 : i32
    %c0_i32_1 = arith.constant 0 : i32
    return %arg0, %c0_i32, %c0_i32_0 : i32, i32, i32
  }
}

</mosaic_0001>

<llo_original>
// kernel: residual_block.3
$region0: #{residual_block.3}
  #allocation0 [shape = 'u32[]', space=smem, size = 0x4, offset = 0x4, fixed_abs, tag = 'smem constant byte address 0x4 - core index']
  #allocation1 [shape = 'u32[72,128]{1,0:T(1,128)}', space=vmem, size = 0x9000, scoped, tag = 'internal scratch']
  %s0 = inlined_call_operand.vmem [shape: bf16[2,16,128], index: 0, kind: input, shape index: {}]
  %s1 = inlined_call_operand.vmem [shape: bf16[3,128,128], index: 1, kind: input, shape index: {}]
  %s2 = inlined_call_operand.vmem [shape: bf16[2,16,128], index: 2, kind: output, shape index: {0}]
  %s3 = inlined_call_operand.vmem [shape: f32[2,2,128], index: 3, kind: output, shape index: {1}]
  %4 = xla_tuple %s2, %s3
  %s5 = sld [smem:[#allocation0]]
  $region49: #{residual_block.3} parent=0
    _
  %s7 = ssub.s32 1, %s5
  %s8 = scalar_select 0, %s7, %s5
  loop: start=0, step=1, limit=4
  $region2: #{residual_block.3} parent=0 // loop_pre_header
    _
  $region3: #{residual_block.3} parent=0 // loop_header
    %s10 = sphi 0, %s14
    %p11 = scmp.ge.s32.totalorder %s10, 4
    %s20 = sphi 0, %s22
    %s23 = sphi 0, %s20
    %s24 = sphi 0, %s23
    %s40 = sphi 0, %s24
    %s44 = sphi 0, %s44
    %s46 = sphi 0, %s44
    %s47 = sphi 0, %s46
    %s61 = sphi 0, %s47
    %s67 = sphi 0, %s69
    %s70 = sphi 0, %s67
    %s71 = sphi 0, %s70
    %s87 = sphi 0, %s71
    %s93 = sphi 0, %s95
    %s96 = sphi 0, %s93
    %s97 = sphi 0, %s96
    %s113 = sphi 0, %s97
  $region4: #{residual_block.3} parent=0 // loop_header_branch
    %13 = sbr.rel (%p11) target = $region8
  $region5: #{residual_block.3} parent=0 // loop_body
    %s15 = ssub.s32 %s10, 1
    %s16 = ssub.s32 %s10, 2
    %s17 = sadd.s32 %s10, 1
    %s18 = ssub.s32 %s10, %s17
    %p19 = scmp.eq.s32.totalorder %s18, 0
    %s21 = sadd.s32 %s20, 1
    %s22 = scalar_select %p19, %s20, %s21
    %p25 = pneg %p19
    %p26 = scmp.eq.s32.totalorder %s10, 1
    %p27 = por %p25, %p26
    %p28 = scmp.ne.s32.totalorder %s20, %s23
    %p29 = scmp.eq.s32.totalorder %s10, 0
    %p30 = por %p28, %p29
    %p31 = scmp.ne.s32.totalorder %s20, %s23
    %p32 = scmp.eq.s32.totalorder %s15, 1
    %p33 = por %p31, %p32
    %p34 = scmp.ne.s32.totalorder %s23, %s24
    %p35 = scmp.eq.s32.totalorder %s15, 0
    %p36 = por %p34, %p35
    %p37 = scmp.ne.s32.totalorder %s23, %s24
    %p38 = scmp.eq.s32.totalorder %s16, 1
    %p39 = por %p37, %p38
    %p41 = scmp.ne.s32.totalorder %s24, %s40
    %p42 = scmp.eq.s32.totalorder %s16, 0
    %p43 = por %p41, %p42
    %s45 = sadd.s32 %s44, 1
    %p48 = scmp.eq.s32.totalorder %s10, 1
    %p49 = scmp.ne.s32.totalorder %s44, %s46
    %p50 = scmp.eq.s32.totalorder %s10, 0
    %p51 = por %p49, %p50
    %p52 = scmp.ne.s32.totalorder %s44, %s46
    %p53 = scmp.eq.s32.totalorder %s15, 1
    %p54 = por %p52, %p53
    %p55 = scmp.ne.s32.totalorder %s46, %s47
    %p56 = scmp.eq.s32.totalorder %s15, 0
    %p57 = por %p55, %p56
    %p58 = scmp.ne.s32.totalorder %s46, %s47
    %p59 = scmp.eq.s32.totalorder %s16, 1
    %p60 = por %p58, %p59
    %p62 = scmp.ne.s32.totalorder %s47, %s61
    %p63 = scmp.eq.s32.totalorder %s16, 0
    %p64 = por %p62, %p63
    %s65 = ssub.s32 %s10, %s17
    %p66 = scmp.eq.s32.totalorder %s65, 0
    %s68 = sadd.s32 %s67, 1
    %s69 = scalar_select %p66, %s67, %s68
    %p72 = pneg %p66
    %p73 = scmp.eq.s32.totalorder %s10, 1
    %p74 = por %p72, %p73
    %p75 = scmp.ne.s32.totalorder %s67, %s70
    %p76 = scmp.eq.s32.totalorder %s10, 0
    %p77 = por %p75, %p76
    %p78 = scmp.ne.s32.totalorder %s67, %s70
    %p79 = scmp.eq.s32.totalorder %s15, 1
    %p80 = por %p78, %p79
    %p81 = scmp.ne.s32.totalorder %s70, %s71
    %p82 = scmp.eq.s32.totalorder %s15, 0
    %p83 = por %p81, %p82
    %p84 = scmp.ne.s32.totalorder %s70, %s71
    %p85 = scmp.eq.s32.totalorder %s16, 1
    %p86 = por %p84, %p85
    %p88 = scmp.ne.s32.totalorder %s71, %s87
    %p89 = scmp.eq.s32.totalorder %s16, 0
    %p90 = por %p88, %p89
    %s91 = ssub.s32 %s10, %s17
    %p92 = scmp.eq.s32.totalorder %s91, 0
    %s94 = sadd.s32 %s93, 1
    %s95 = scalar_select %p92, %s93, %s94
    %p98 = pneg %p92
    %p99 = scmp.eq.s32.totalorder %s10, 1
    %p100 = por %p98, %p99
    %p101 = scmp.ne.s32.totalorder %s93, %s96
    %p102 = scmp.eq.s32.totalorder %s10, 0
    %p103 = por %p101, %p102
    %p104 = scmp.ne.s32.totalorder %s93, %s96
    %p105 = scmp.eq.s32.totalorder %s15, 1
    %p106 = por %p104, %p105
    %p107 = scmp.ne.s32.totalorder %s96, %s97
    %p108 = scmp.eq.s32.totalorder %s15, 0
    %p109 = por %p107, %p108
    %p110 = scmp.ne.s32.totalorder %s96, %s97
    %p111 = scmp.eq.s32.totalorder %s16, 1
    %p112 = por %p110, %p111
    %p114 = scmp.ne.s32.totalorder %s97, %s113
    %p115 = scmp.eq.s32.totalorder %s16, 0
    %p116 = por %p114, %p115
    %p117 = scmp.le.s32.totalorder 1, %s10
    %p118 = scmp.lt.s32.totalorder %s10, 3
    %p119 = pnand %p117, %p118
    %p120 = pneg %p119
    // Predicated region
    $region9: #{residual_block.3} parent=5 // pred_check
      _
    $region10: #{residual_block.3} parent=5 // pred_check_branch
      %122 = sbr.rel (%p119) target = $region12
    $region11: #{residual_block.3} parent=5 // pred_region
      %s123 = ssub.s32 %s10, 1
      // Predicated region
      $region13: #{residual_block.3} parent=11 // pred_check
        %p124 = pneg %p57
      $region14: #{residual_block.3} parent=11 // pred_check_branch
        %126 = sbr.rel (%p124) target = $region16
      $region15: #{residual_block.3} parent=11 // pred_region
        _
      $region16: #{residual_block.3} parent=11 // pred_fallthru
        _
    $region12: #{residual_block.3} parent=5 // pred_fallthru
      _
    %p127 = scmp.lt.s32.totalorder %s10, 2
    // Predicated region
    $region17: #{residual_block.3} parent=5 // pred_check
      %p128 = pneg %p127
    $region18: #{residual_block.3} parent=5 // pred_check_branch
      %130 = sbr.rel (%p128) target = $region20
    $region19: #{residual_block.3} parent=5 // pred_region
      // Predicated region
      $region21: #{residual_block.3} parent=19 // pred_check
        %p131 = pneg %p30
      $region22: #{residual_block.3} parent=19 // pred_check_branch
        %133 = sbr.rel (%p131) target = $region24
      $region23: #{residual_block.3} parent=19 // pred_region
        %p134 = scmp.lt.s32.totalorder %s10, 1
        %s135 = scalar_select %p134, %s10, 1
        %s136 = smul.addr %s135, 2
        %s137 = smul.addr %s136, 4
        %s138 = scalar_lea.vmem %s0, %s137
      $region24: #{residual_block.3} parent=19 // pred_fallthru
        _
    $region20: #{residual_block.3} parent=5 // pred_fallthru
      _
    %p139 = scmp.le.s32.totalorder 1, %s10
    %p140 = scmp.lt.s32.totalorder %s10, 3
    %p141 = pnand %p139, %p140
    %p142 = pneg %p141
    // Predicated region
    $region25: #{residual_block.3} parent=5 // pred_check
      _
    $region26: #{residual_block.3} parent=5 // pred_check_branch
      %144 = sbr.rel (%p141) target = $region28
    $region27: #{residual_block.3} parent=5 // pred_region
      %s145 = ssub.s32 %s10, 1
      %p146 = scmp.lt.s32.totalorder %s15, 1
      %s147 = scalar_select %p146, %s15, 1
      %s148 = smul.addr %s147, 2
      %s149 = smul.addr %s148, 4
      %s150 = scalar_lea.vmem %s0, %s149
      %p151 = pneg %p36
      %p152 = pneg %p33
      %p153 = pneg %p57
      %p154 = pneg %p54
      %p155 = pneg %p83
      %p156 = pneg %p80
      %p157 = scmp.lt.s32.totalorder %s15, 1
      %s158 = scalar_select %p157, %s15, 1
      %s159 = smul.addr %s158, 2
      %s160 = smul.addr %s159, 4
      %s161 = scalar_lea.vmem %s2, %s160
      %p162 = pneg %p109
      %p163 = pneg %p106
      %p164 = scmp.lt.s32.totalorder %s15, 1
      %s165 = scalar_select %p164, %s15, 1
      %s166 = smul.addr %s165, 2
      %s167 = scalar_lea.vmem %s3, %s166
      %p168 = scmp.lt.s32.totalorder %s15, 1
      %s169 = scalar_select %p168, %s15, 1
      %s170 = smul.addr %s169, 2
      %s171 = smul.addr %s170, 4
      %s172 = scalar_lea.vmem %s0, %s171
      %p173 = scmp.lt.s32.totalorder %s15, 1
      %s174 = scalar_select %p173, %s15, 1
      %s175 = smul.addr %s174, 2
      %s176 = smul.addr %s175, 4
      %s177 = scalar_lea.vmem %s2, %s176
      %p178 = scmp.lt.s32.totalorder %s15, 1
      %s179 = scalar_select %p178, %s15, 1
      %s180 = smul.addr %s179, 2
      %s181 = scalar_lea.vmem %s3, %s180
      %v183 = vld [vmem:[%s172] sm:$0xf]
      %v184 = vld [vmem:[%s172 + $0x4] sm:$0xf]
      %v187 = vunpack.c.l.b16 %v183
      %v188 = vunpack.c.l.b16 %v184
      %v189 = vpack.c.b16 %v188, %v187
      %v191 = vshrl.u32 %v189, 16
      %v193 = vrot.slane %v191, 7
      %v194 = vshll.u32 %v189, 16
      %v196 = vor.u32 %v193, %v194
      %vm198 = vcmask 1040384
      %vm199 = vsmask.f32 256
      %vm200 = vmand %vm198, %vm199
      %v201 = vsel %vm200, 0, %v196
      %v202 = vrot.slane %v194, 1
      %v203 = vor.u32 %v191, %v202
      %vm205 = vcmask 1047552
      %vm206 = vsmask.f32 7424
      %vm207 = vmand %vm205, %vm206
      %v208 = vsel %vm207, %v203, 0
      %v209 = vld [vmem:[%s1] sm:$0xf]
      %v210 = vld [vmem:[%s1 + $0x4] sm:$0xf]
      %v211 = vld [vmem:[%s1 + $0x8] sm:$0xf]
      %v212 = vld [vmem:[%s1 + $0xc] sm:$0xf]
      %v213 = vld [vmem:[%s1 + $0x10] sm:$0xf]
      %v214 = vld [vmem:[%s1 + $0x14] sm:$0xf]
      %v215 = vld [vmem:[%s1 + $0x18] sm:$0xf]
      %v216 = vld [vmem:[%s1 + $0x1c] sm:$0xf]
      %v217 = vld [vmem:[%s1 + $0x20] sm:$0xf]
      %v218 = vld [vmem:[%s1 + $0x24] sm:$0xf]
      %v219 = vld [vmem:[%s1 + $0x28] sm:$0xf]
      %v220 = vld [vmem:[%s1 + $0x2c] sm:$0xf]
      %v221 = vld [vmem:[%s1 + $0x30] sm:$0xf]
      %v222 = vld [vmem:[%s1 + $0x34] sm:$0xf]
      %v223 = vld [vmem:[%s1 + $0x38] sm:$0xf]
      %v224 = vld [vmem:[%s1 + $0x3c] sm:$0xf]
      %s225 = scalar_lea.vmem %s1, 64
      %v226 = vld [vmem:[%s225] sm:$0xf]
      %v227 = vld [vmem:[%s225 + $0x4] sm:$0xf]
      %v228 = vld [vmem:[%s225 + $0x8] sm:$0xf]
      %v229 = vld [vmem:[%s225 + $0xc] sm:$0xf]
      %v230 = vld [vmem:[%s225 + $0x10] sm:$0xf]
      %v231 = vld [vmem:[%s225 + $0x14] sm:$0xf]
      %v232 = vld [vmem:[%s225 + $0x18] sm:$0xf]
      %v233 = vld [vmem:[%s225 + $0x1c] sm:$0xf]
      %v234 = vld [vmem:[%s225 + $0x20] sm:$0xf]
      %v235 = vld [vmem:[%s225 + $0x24] sm:$0xf]
      %v236 = vld [vmem:[%s225 + $0x28] sm:$0xf]
      %v237 = vld [vmem:[%s225 + $0x2c] sm:$0xf]
      %v238 = vld [vmem:[%s225 + $0x30] sm:$0xf]
      %v239 = vld [vmem:[%s225 + $0x34] sm:$0xf]
      %v240 = vld [vmem:[%s225 + $0x38] sm:$0xf]
      %v241 = vld [vmem:[%s225 + $0x3c] sm:$0xf]
      %v259 = vunpack.c.l.b16 %v226
      %v260 = vunpack.c.l.b16 %v227
      %v261 = vunpack.c.l.b16 %v228
      %v262 = vunpack.c.l.b16 %v229
      %v263 = vunpack.c.l.b16 %v230
      %v264 = vunpack.c.l.b16 %v231
      %v265 = vunpack.c.l.b16 %v232
      %v266 = vunpack.c.l.b16 %v233
      %v267 = vunpack.c.l.b16 %v234
      %v268 = vunpack.c.l.b16 %v235
      %v269 = vunpack.c.l.b16 %v236
      %v270 = vunpack.c.l.b16 %v237
      %v271 = vunpack.c.l.b16 %v238
      %v272 = vunpack.c.l.b16 %v239
      %v273 = vunpack.c.l.b16 %v240
      %v274 = vunpack.c.l.b16 %v241
      %v275 = vpack.c.b16 %v260, %v259
      %v276 = vpack.c.b16 %v262, %v261
      %v277 = vpack.c.b16 %v264, %v263
      %v278 = vpack.c.b16 %v266, %v265
      %v279 = vpack.c.b16 %v268, %v267
      %v280 = vpack.c.b16 %v270, %v269
      %v281 = vpack.c.b16 %v272, %v271
      %v282 = vpack.c.b16 %v274, %v273
      %291 = vmatpush.bf16.msra.mxu0 %v282
      %292 = vmatpush.bf16.msra.mxu0 %v281
      %293 = vmatpush.bf16.msra.mxu0 %v280
      %294 = vmatpush.bf16.msra.mxu0 %v279
      %295 = vmatpush.bf16.msra.mxu0 %v278
      %296 = vmatpush.bf16.msra.mxu0 %v277
      %297 = vmatpush.bf16.msra.mxu0 %v276
      %298 = vmatpush.bf16.msra.mxu0 %v275
      %299 = vmatmul.bf16.gmra.mxu0 %v189
      %v300 = vpop.f32.mrf.mxu0
      %v301 = vadd.f32 0.0, %v300
      %v302 = vpop.f32.mrf.mxu0
      %v303 = vadd.f32 0.0, %v302
      %304 = vdwg.mxu0
      %v321 = vunpack.c.l.b16 %v209
      %v322 = vunpack.c.l.b16 %v210
      %v323 = vunpack.c.l.b16 %v211
      %v324 = vunpack.c.l.b16 %v212
      %v325 = vunpack.c.l.b16 %v213
      %v326 = vunpack.c.l.b16 %v214
      %v327 = vunpack.c.l.b16 %v215
      %v328 = vunpack.c.l.b16 %v216
      %v329 = vunpack.c.l.b16 %v217
      %v330 = vunpack.c.l.b16 %v218
      %v331 = vunpack.c.l.b16 %v219
      %v332 = vunpack.c.l.b16 %v220
      %v333 = vunpack.c.l.b16 %v221
      %v334 = vunpack.c.l.b16 %v222
      %v335 = vunpack.c.l.b16 %v223
      %v336 = vunpack.c.l.b16 %v224
      %v337 = vpack.c.b16 %v322, %v321
      %v338 = vpack.c.b16 %v324, %v323
      %v339 = vpack.c.b16 %v326, %v325
      %v340 = vpack.c.b16 %v328, %v327
      %v341 = vpack.c.b16 %v330, %v329
      %v342 = vpack.c.b16 %v332, %v331
      %v343 = vpack.c.b16 %v334, %v333
      %v344 = vpack.c.b16 %v336, %v335
      %353 = vmatpush.bf16.msra.mxu0 %v344
      %354 = vmatpush.bf16.msra.mxu0 %v343
      %355 = vmatpush.bf16.msra.mxu0 %v342
      %356 = vmatpush.bf16.msra.mxu0 %v341
      %357 = vmatpush.bf16.msra.mxu0 %v340
      %358 = vmatpush.bf16.msra.mxu0 %v339
      %359 = vmatpush.bf16.msra.mxu0 %v338
      %360 = vmatpush.bf16.msra.mxu0 %v337
      %361 = vmatmul.bf16.gmra.mxu0 %v201
      %v362 = vpop.f32.mrf.mxu0
      %v363 = vadd.f32 %v301, %v362
      %v364 = vpop.f32.mrf.mxu0
      %v365 = vadd.f32 %v303, %v364
      %366 = vdwg.mxu0
      %s367 = scalar_lea.vmem %s1, 128
      %v368 = vld [vmem:[%s367] sm:$0xf]
      %v369 = vld [vmem:[%s367 + $0x4] sm:$0xf]
      %v370 = vld [vmem:[%s367 + $0x8] sm:$0xf]
      %v371 = vld [vmem:[%s367 + $0xc] sm:$0xf]
      %v372 = vld [vmem:[%s367 + $0x10] sm:$0xf]
      %v373 = vld [vmem:[%s367 + $0x14] sm:$0xf]
      %v374 = vld [vmem:[%s367 + $0x18] sm:$0xf]
      %v375 = vld [vmem:[%s367 + $0x1c] sm:$0xf]
      %v376 = vld [vmem:[%s367 + $0x20] sm:$0xf]
      %v377 = vld [vmem:[%s367 + $0x24] sm:$0xf]
      %v378 = vld [vmem:[%s367 + $0x28] sm:$0xf]
      %v379 = vld [vmem:[%s367 + $0x2c] sm:$0xf]
      %v380 = vld [vmem:[%s367 + $0x30] sm:$0xf]
      %v381 = vld [vmem:[%s367 + $0x34] sm:$0xf]
      %v382 = vld [vmem:[%s367 + $0x38] sm:$0xf]
      %v383 = vld [vmem:[%s367 + $0x3c] sm:$0xf]
      %v400 = vunpack.c.l.b16 %v368
      %v401 = vunpack.c.l.b16 %v369
      %v402 = vunpack.c.l.b16 %v370
      %v403 = vunpack.c.l.b16 %v371
      %v404 = vunpack.c.l.b16 %v372
      %v405 = vunpack.c.l.b16 %v373
      %v406 = vunpack.c.l.b16 %v374
      %v407 = vunpack.c.l.b16 %v375
      %v408 = vunpack.c.l.b16 %v376
      %v409 = vunpack.c.l.b16 %v377
      %v410 = vunpack.c.l.b16 %v378
      %v411 = vunpack.c.l.b16 %v379
      %v412 = vunpack.c.l.b16 %v380
      %v413 = vunpack.c.l.b16 %v381
      %v414 = vunpack.c.l.b16 %v382
      %v415 = vunpack.c.l.b16 %v383
      %v416 = vpack.c.b16 %v401, %v400
      %v417 = vpack.c.b16 %v403, %v402
      %v418 = vpack.c.b16 %v405, %v404
      %v419 = vpack.c.b16 %v407, %v406
      %v420 = vpack.c.b16 %v409, %v408
      %v421 = vpack.c.b16 %v411, %v410
      %v422 = vpack.c.b16 %v413, %v412
      %v423 = vpack.c.b16 %v415, %v414
      %432 = vmatpush.bf16.msra.mxu0 %v423
      %433 = vmatpush.bf16.msra.mxu0 %v422
      %434 = vmatpush.bf16.msra.mxu0 %v421
      %435 = vmatpush.bf16.msra.mxu0 %v420
      %436 = vmatpush.bf16.msra.mxu0 %v419
      %437 = vmatpush.bf16.msra.mxu0 %v418
      %438 = vmatpush.bf16.msra.mxu0 %v417
      %439 = vmatpush.bf16.msra.mxu0 %v416
      %440 = vmatmul.bf16.gmra.mxu0 %v208
      %v441 = vpop.f32.mrf.mxu0
      %v442 = vadd.f32 0.0, %v441
      %v443 = vpop.f32.mrf.mxu0
      %v444 = vadd.f32 0.0, %v443
      %445 = vdwg.mxu0
      %v446 = vadd.f32 %v363, %v442
      %v447 = vadd.f32 %v365, %v444
      %v448 = vadd.f32 %v446, %v447
      %v449 = vrot.slane %v448, 4
      %v450 = vadd.f32 %v448, %v449
      %v451 = vrot.slane %v450, 2
      %v452 = vadd.f32 %v450, %v451
      %v453 = vrot.slane %v452, 1
      %v454 = vadd.f32 %v452, %v453
      %v455 = vmul.f32 %v446, %v446
      %v456 = vmul.f32 %v447, %v447
      %v457 = vadd.f32 %v455, %v456
      %v458 = vrot.slane %v457, 4
      %v459 = vadd.f32 %v457, %v458
      %v460 = vrot.slane %v459, 2
      %v461 = vadd.f32 %v459, %v460
      %v462 = vrot.slane %v461, 1
      %v463 = vadd.f32 %v461, %v462
      %vm464 = vcmask 1040384
      %v465 = vsel %vm464, %v454, %v463
      %466 = vst [vmem:[%s181] sm:$0x3] %v465
      %v467 = vpack.c.bf16 %v446, %v446
      %v468 = vpack.c.bf16 %v447, %v447
      %469 = vst [vmem:[%s177] sm:$0xf] %v467
      %470 = vst [vmem:[%s177 + $0x4] sm:$0xf] %v468
      %p471 = scmp.lt.s32.totalorder %s15, 1
      %s472 = scalar_select %p471, %s15, 1
      %s473 = smul.addr %s472, 2
      %s474 = smul.addr %s473, 4
      %s475 = scalar_lea.vmem %s2, %s474
      %p476 = scmp.lt.s32.totalorder %s15, 1
      %s477 = scalar_select %p476, %s15, 1
      %s478 = smul.addr %s477, 2
      %s479 = scalar_lea.vmem %s3, %s478
      // Predicated region
      $region29: #{residual_block.3} parent=27 // pred_check
        %p480 = pneg %p80
      $region30: #{residual_block.3} parent=27 // pred_check_branch
        %482 = sbr.rel (%p480) target = $region32
      $region31: #{residual_block.3} parent=27 // pred_region
        _
      $region32: #{residual_block.3} parent=27 // pred_fallthru
        _
      // Predicated region
      $region33: #{residual_block.3} parent=27 // pred_check
        %p483 = pneg %p106
      $region34: #{residual_block.3} parent=27 // pred_check_branch
        %485 = sbr.rel (%p483) target = $region36
      $region35: #{residual_block.3} parent=27 // pred_region
        _
      $region36: #{residual_block.3} parent=27 // pred_fallthru
        _
    $region28: #{residual_block.3} parent=5 // pred_fallthru
      _
    %p486 = scmp.le.s32.totalorder 2, %s10
    // Predicated region
    $region37: #{residual_block.3} parent=5 // pred_check
      %p487 = pneg %p486
    $region38: #{residual_block.3} parent=5 // pred_check_branch
      %489 = sbr.rel (%p487) target = $region40
    $region39: #{residual_block.3} parent=5 // pred_region
      %s490 = ssub.s32 %s10, 2
      // Predicated region
      $region41: #{residual_block.3} parent=39 // pred_check
        %p491 = pneg %p86
      $region42: #{residual_block.3} parent=39 // pred_check_branch
        %493 = sbr.rel (%p491) target = $region44
      $region43: #{residual_block.3} parent=39 // pred_region
        %p494 = scmp.lt.s32.totalorder %s16, 1
        %s495 = scalar_select %p494, %s16, 1
        %s496 = smul.addr %s495, 2
        %s497 = smul.addr %s496, 4
        %s498 = scalar_lea.vmem %s2, %s497
      $region44: #{residual_block.3} parent=39 // pred_fallthru
        _
      // Predicated region
      $region45: #{residual_block.3} parent=39 // pred_check
        %p499 = pneg %p112
      $region46: #{residual_block.3} parent=39 // pred_check_branch
        %501 = sbr.rel (%p499) target = $region48
      $region47: #{residual_block.3} parent=39 // pred_region
        %p502 = scmp.lt.s32.totalorder %s16, 1
        %s503 = scalar_select %p502, %s16, 1
        %s504 = smul.addr %s503, 2
        %s505 = scalar_lea.vmem %s3, %s504
      $region48: #{residual_block.3} parent=39 // pred_fallthru
        _
    $region40: #{residual_block.3} parent=5 // pred_fallthru
      _
  $region6: #{residual_block.3} parent=0 // loop_footer
    %s14 = sadd.s32 1, %s10
  $region7: #{residual_block.3} parent=0 // loop_footer_branch
    %9 = sbr.rel target = $region3
  $region8: #{residual_block.3} parent=0 // loop_exit
    _

// kernel: residual_block.5
$region0: #{residual_block.5}
  #allocation0 [shape = 'u32[]', space=smem, size = 0x4, offset = 0x4, fixed_abs, tag = 'smem constant byte address 0x4 - core index']
  #allocation1 [shape = 'u32[72,128]{1,0:T(1,128)}', space=vmem, size = 0x9000, scoped, tag = 'internal scratch']
  %s0 = inlined_call_operand.vmem [shape: bf16[2,16,128], index: 0, kind: input, shape index: {}]
  %s1 = inlined_call_operand.vmem [shape: f32[2,128], index: 1, kind: input, shape index: {}]
  %s2 = inlined_call_operand.vmem [shape: bf16[2,16,128], index: 2, kind: input, shape index: {}]
  %s3 = inlined_call_operand.vmem [shape: bf16[128,128], index: 3, kind: input, shape index: {}]
  %s4 = inlined_call_operand.vmem [shape: f32[1,128], index: 4, kind: input, shape index: {}]
  %s5 = inlined_call_operand.vmem [shape: f32[2,16,128], index: 5, kind: output, shape index: {}]
  %s6 = sld [smem:[#allocation0]]
  $region53: #{residual_block.5} parent=0
    _
  %s8 = ssub.s32 1, %s6
  %s9 = scalar_select 0, %s8, %s6
  loop: start=0, step=1, limit=4
  $region2: #{residual_block.5} parent=0 // loop_pre_header
    _
  $region3: #{residual_block.5} parent=0 // loop_header
    %s11 = sphi 0, %s15
    %p12 = scmp.ge.s32.totalorder %s11, 4
    %s21 = sphi 0, %s23
    %s24 = sphi 0, %s21
    %s25 = sphi 0, %s24
    %s41 = sphi 0, %s25
    %s45 = sphi 0, %s45
    %s47 = sphi 0, %s45
    %s48 = sphi 0, %s47
    %s62 = sphi 0, %s48
    %s68 = sphi 0, %s70
    %s71 = sphi 0, %s68
    %s72 = sphi 0, %s71
    %s88 = sphi 0, %s72
    %s92 = sphi 0, %s92
    %s94 = sphi 0, %s92
    %s95 = sphi 0, %s94
    %s109 = sphi 0, %s95
    %s113 = sphi 0, %s113
    %s115 = sphi 0, %s113
    %s116 = sphi 0, %s115
    %s130 = sphi 0, %s116
    %s136 = sphi 0, %s138
    %s139 = sphi 0, %s136
    %s140 = sphi 0, %s139
    %s156 = sphi 0, %s140
  $region4: #{residual_block.5} parent=0 // loop_header_branch
    %14 = sbr.rel (%p12) target = $region8
  $region5: #{residual_block.5} parent=0 // loop_body
    %s16 = ssub.s32 %s11, 1
    %s17 = ssub.s32 %s11, 2
    %s18 = sadd.s32 %s11, 1
    %s19 = ssub.s32 %s11, %s18
    %p20 = scmp.eq.s32.totalorder %s19, 0
    %s22 = sadd.s32 %s21, 1
    %s23 = scalar_select %p20, %s21, %s22
    %p26 = pneg %p20
    %p27 = scmp.eq.s32.totalorder %s11, 1
    %p28 = por %p26, %p27
    %p29 = scmp.ne.s32.totalorder %s21, %s24
    %p30 = scmp.eq.s32.totalorder %s11, 0
    %p31 = por %p29, %p30
    %p32 = scmp.ne.s32.totalorder %s21, %s24
    %p33 = scmp.eq.s32.totalorder %s16, 1
    %p34 = por %p32, %p33
    %p35 = scmp.ne.s32.totalorder %s24, %s25
    %p36 = scmp.eq.s32.totalorder %s16, 0
    %p37 = por %p35, %p36
    %p38 = scmp.ne.s32.totalorder %s24, %s25
    %p39 = scmp.eq.s32.totalorder %s17, 1
    %p40 = por %p38, %p39
    %p42 = scmp.ne.s32.totalorder %s25, %s41
    %p43 = scmp.eq.s32.totalorder %s17, 0
    %p44 = por %p42, %p43
    %s46 = sadd.s32 %s45, 1
    %p49 = scmp.eq.s32.totalorder %s11, 1
    %p50 = scmp.ne.s32.totalorder %s45, %s47
    %p51 = scmp.eq.s32.totalorder %s11, 0
    %p52 = por %p50, %p51
    %p53 = scmp.ne.s32.totalorder %s45, %s47
    %p54 = scmp.eq.s32.totalorder %s16, 1
    %p55 = por %p53, %p54
    %p56 = scmp.ne.s32.totalorder %s47, %s48
    %p57 = scmp.eq.s32.totalorder %s16, 0
    %p58 = por %p56, %p57
    %p59 = scmp.ne.s32.totalorder %s47, %s48
    %p60 = scmp.eq.s32.totalorder %s17, 1
    %p61 = por %p59, %p60
    %p63 = scmp.ne.s32.totalorder %s48, %s62
    %p64 = scmp.eq.s32.totalorder %s17, 0
    %p65 = por %p63, %p64
    %s66 = ssub.s32 %s11, %s18
    %p67 = scmp.eq.s32.totalorder %s66, 0
    %s69 = sadd.s32 %s68, 1
    %s70 = scalar_select %p67, %s68, %s69
    %p73 = pneg %p67
    %p74 = scmp.eq.s32.totalorder %s11, 1
    %p75 = por %p73, %p74
    %p76 = scmp.ne.s32.totalorder %s68, %s71
    %p77 = scmp.eq.s32.totalorder %s11, 0
    %p78 = por %p76, %p77
    %p79 = scmp.ne.s32.totalorder %s68, %s71
    %p80 = scmp.eq.s32.totalorder %s16, 1
    %p81 = por %p79, %p80
    %p82 = scmp.ne.s32.totalorder %s71, %s72
    %p83 = scmp.eq.s32.totalorder %s16, 0
    %p84 = por %p82, %p83
    %p85 = scmp.ne.s32.totalorder %s71, %s72
    %p86 = scmp.eq.s32.totalorder %s17, 1
    %p87 = por %p85, %p86
    %p89 = scmp.ne.s32.totalorder %s72, %s88
    %p90 = scmp.eq.s32.totalorder %s17, 0
    %p91 = por %p89, %p90
    %s93 = sadd.s32 %s92, 1
    %p96 = scmp.eq.s32.totalorder %s11, 1
    %p97 = scmp.ne.s32.totalorder %s92, %s94
    %p98 = scmp.eq.s32.totalorder %s11, 0
    %p99 = por %p97, %p98
    %p100 = scmp.ne.s32.totalorder %s92, %s94
    %p101 = scmp.eq.s32.totalorder %s16, 1
    %p102 = por %p100, %p101
    %p103 = scmp.ne.s32.totalorder %s94, %s95
    %p104 = scmp.eq.s32.totalorder %s16, 0
    %p105 = por %p103, %p104
    %p106 = scmp.ne.s32.totalorder %s94, %s95
    %p107 = scmp.eq.s32.totalorder %s17, 1
    %p108 = por %p106, %p107
    %p110 = scmp.ne.s32.totalorder %s95, %s109
    %p111 = scmp.eq.s32.totalorder %s17, 0
    %p112 = por %p110, %p111
    %s114 = sadd.s32 %s113, 1
    %p117 = scmp.eq.s32.totalorder %s11, 1
    %p118 = scmp.ne.s32.totalorder %s113, %s115
    %p119 = scmp.eq.s32.totalorder %s11, 0
    %p120 = por %p118, %p119
    %p121 = scmp.ne.s32.totalorder %s113, %s115
    %p122 = scmp.eq.s32.totalorder %s16, 1
    %p123 = por %p121, %p122
    %p124 = scmp.ne.s32.totalorder %s115, %s116
    %p125 = scmp.eq.s32.totalorder %s16, 0
    %p126 = por %p124, %p125
    %p127 = scmp.ne.s32.totalorder %s115, %s116
    %p128 = scmp.eq.s32.totalorder %s17, 1
    %p129 = por %p127, %p128
    %p131 = scmp.ne.s32.totalorder %s116, %s130
    %p132 = scmp.eq.s32.totalorder %s17, 0
    %p133 = por %p131, %p132
    %s134 = ssub.s32 %s11, %s18
    %p135 = scmp.eq.s32.totalorder %s134, 0
    %s137 = sadd.s32 %s136, 1
    %s138 = scalar_select %p135, %s136, %s137
    %p141 = pneg %p135
    %p142 = scmp.eq.s32.totalorder %s11, 1
    %p143 = por %p141, %p142
    %p144 = scmp.ne.s32.totalorder %s136, %s139
    %p145 = scmp.eq.s32.totalorder %s11, 0
    %p146 = por %p144, %p145
    %p147 = scmp.ne.s32.totalorder %s136, %s139
    %p148 = scmp.eq.s32.totalorder %s16, 1
    %p149 = por %p147, %p148
    %p150 = scmp.ne.s32.totalorder %s139, %s140
    %p151 = scmp.eq.s32.totalorder %s16, 0
    %p152 = por %p150, %p151
    %p153 = scmp.ne.s32.totalorder %s139, %s140
    %p154 = scmp.eq.s32.totalorder %s17, 1
    %p155 = por %p153, %p154
    %p157 = scmp.ne.s32.totalorder %s140, %s156
    %p158 = scmp.eq.s32.totalorder %s17, 0
    %p159 = por %p157, %p158
    %p160 = scmp.le.s32.totalorder 1, %s11
    %p161 = scmp.lt.s32.totalorder %s11, 3
    %p162 = pnand %p160, %p161
    %p163 = pneg %p162
    // Predicated region
    $region9: #{residual_block.5} parent=5 // pred_check
      _
    $region10: #{residual_block.5} parent=5 // pred_check_branch
      %165 = sbr.rel (%p162) target = $region12
    $region11: #{residual_block.5} parent=5 // pred_region
      %s166 = ssub.s32 %s11, 1
      // Predicated region
      $region13: #{residual_block.5} parent=11 // pred_check
        %p167 = pneg %p58
      $region14: #{residual_block.5} parent=11 // pred_check_branch
        %169 = sbr.rel (%p167) target = $region16
      $region15: #{residual_block.5} parent=11 // pred_region
        _
      $region16: #{residual_block.5} parent=11 // pred_fallthru
        _
      // Predicated region
      $region17: #{residual_block.5} parent=11 // pred_check
        %p170 = pneg %p105
      $region18: #{residual_block.5} parent=11 // pred_check_branch
        %172 = sbr.rel (%p170) target = $region20
      $region19: #{residual_block.5} parent=11 // pred_region
        _
      $region20: #{residual_block.5} parent=11 // pred_fallthru
        _
      // Predicated region
      $region21: #{residual_block.5} parent=11 // pred_check
        %p173 = pneg %p126
      $region22: #{residual_block.5} parent=11 // pred_check_branch
        %175 = sbr.rel (%p173) target = $region24
      $region23: #{residual_block.5} parent=11 // pred_region
        _
      $region24: #{residual_block.5} parent=11 // pred_fallthru
        _
    $region12: #{residual_block.5} parent=5 // pred_fallthru
      _
    %p176 = scmp.lt.s32.totalorder %s11, 2
    // Predicated region
    $region25: #{residual_block.5} parent=5 // pred_check
      %p177 = pneg %p176
    $region26: #{residual_block.5} parent=5 // pred_check_branch
      %179 = sbr.rel (%p177) target = $region28
    $region27: #{residual_block.5} parent=5 // pred_region
      // Predicated region
      $region29: #{residual_block.5} parent=27 // pred_check
        %p180 = pneg %p31
      $region30: #{residual_block.5} parent=27 // pred_check_branch
        %182 = sbr.rel (%p180) target = $region32
      $region31: #{residual_block.5} parent=27 // pred_region
        %p183 = scmp.lt.s32.totalorder %s11, 1
        %s184 = scalar_select %p183, %s11, 1
        %s185 = smul.addr %s184, 2
        %s186 = smul.addr %s185, 4
        %s187 = scalar_lea.vmem %s0, %s186
      $region32: #{residual_block.5} parent=27 // pred_fallthru
        _
      // Predicated region
      $region33: #{residual_block.5} parent=27 // pred_check
        %p188 = pneg %p78
      $region34: #{residual_block.5} parent=27 // pred_check_branch
        %190 = sbr.rel (%p188) target = $region36
      $region35: #{residual_block.5} parent=27 // pred_region
        %p191 = scmp.lt.s32.totalorder %s11, 1
        %s192 = scalar_select %p191, %s11, 1
        %s193 = smul.addr %s192, 2
        %s194 = smul.addr %s193, 4
        %s195 = scalar_lea.vmem %s2, %s194
      $region36: #{residual_block.5} parent=27 // pred_fallthru
        _
    $region28: #{residual_block.5} parent=5 // pred_fallthru
      _
    %p196 = scmp.le.s32.totalorder 1, %s11
    %p197 = scmp.lt.s32.totalorder %s11, 3
    %p198 = pnand %p196, %p197
    %p199 = pneg %p198
    // Predicated region
    $region37: #{residual_block.5} parent=5 // pred_check
      _
    $region38: #{residual_block.5} parent=5 // pred_check_branch
      %201 = sbr.rel (%p198) target = $region40
    $region39: #{residual_block.5} parent=5 // pred_region
      %s202 = ssub.s32 %s11, 1
      %p203 = scmp.lt.s32.totalorder %s16, 1
      %s204 = scalar_select %p203, %s16, 1
      %s205 = smul.addr %s204, 2
      %s206 = smul.addr %s205, 4
      %s207 = scalar_lea.vmem %s0, %s206
      %p208 = pneg %p37
      %p209 = pneg %p34
      %p210 = pneg %p58
      %p211 = pneg %p55
      %p212 = scmp.lt.s32.totalorder %s16, 1
      %s213 = scalar_select %p212, %s16, 1
      %s214 = smul.addr %s213, 2
      %s215 = smul.addr %s214, 4
      %s216 = scalar_lea.vmem %s2, %s215
      %p217 = pneg %p84
      %p218 = pneg %p81
      %p219 = pneg %p105
      %p220 = pneg %p102
      %p221 = pneg %p126
      %p222 = pneg %p123
      %p223 = pneg %p152
      %p224 = pneg %p149
      %p225 = scmp.lt.s32.totalorder %s16, 1
      %s226 = scalar_select %p225, %s16, 1
      %s227 = smul.addr %s226, 2
      %s228 = smul.addr %s227, 8
      %s229 = scalar_lea.vmem %s5, %s228
      %p230 = scmp.lt.s32.totalorder %s16, 1
      %s231 = scalar_select %p230, %s16, 1
      %s232 = smul.addr %s231, 2
      %s233 = smul.addr %s232, 4
      %s234 = scalar_lea.vmem %s0, %s233
      %p235 = scmp.lt.s32.totalorder %s16, 1
      %s236 = scalar_select %p235, %s16, 1
      %s237 = smul.addr %s236, 2
      %s238 = smul.addr %s237, 4
      %s239 = scalar_lea.vmem %s2, %s238
      %p240 = scmp.lt.s32.totalorder %s16, 1
      %s241 = scalar_select %p240, %s16, 1
      %s242 = smul.addr %s241, 2
      %s243 = smul.addr %s242, 8
      %s244 = scalar_lea.vmem %s5, %s243
      %v245 = vld [vmem:[%s1] sm:$0x3]
      %v246 = vld [vmem:[%s234] sm:$0xf]
      %v247 = vld [vmem:[%s234 + $0x4] sm:$0xf]
      %v248 = vunpack.c.l.bf16 %v246
      %v249 = vunpack.c.l.bf16 %v247
      %v250 = vperm.slane %v245, 0
      %v251 = vmul.f32 %v248, %v250
      %v252 = vmul.f32 %v249, %v250
      %v253 = vperm.slane %v245, 1
      %v254 = vadd.f32 %v251, %v253
      %v255 = vadd.f32 %v252, %v253
      %v256 = vld [vmem:[%s239] sm:$0xf]
      %v257 = vld [vmem:[%s239 + $0x4] sm:$0xf]
      %v258 = vld [vmem:[%s3] sm:$0xf]
      %v259 = vld [vmem:[%s3 + $0x4] sm:$0xf]
      %v260 = vld [vmem:[%s3 + $0x8] sm:$0xf]
      %v261 = vld [vmem:[%s3 + $0xc] sm:$0xf]
      %v262 = vld [vmem:[%s3 + $0x10] sm:$0xf]
      %v263 = vld [vmem:[%s3 + $0x14] sm:$0xf]
      %v264 = vld [vmem:[%s3 + $0x18] sm:$0xf]
      %v265 = vld [vmem:[%s3 + $0x1c] sm:$0xf]
      %v266 = vld [vmem:[%s3 + $0x20] sm:$0xf]
      %v267 = vld [vmem:[%s3 + $0x24] sm:$0xf]
      %v268 = vld [vmem:[%s3 + $0x28] sm:$0xf]
      %v269 = vld [vmem:[%s3 + $0x2c] sm:$0xf]
      %v270 = vld [vmem:[%s3 + $0x30] sm:$0xf]
      %v271 = vld [vmem:[%s3 + $0x34] sm:$0xf]
      %v272 = vld [vmem:[%s3 + $0x38] sm:$0xf]
      %v273 = vld [vmem:[%s3 + $0x3c] sm:$0xf]
      %v276 = vunpack.c.l.b16 %v256
      %v277 = vunpack.c.l.b16 %v257
      %v278 = vpack.c.b16 %v277, %v276
      %v296 = vunpack.c.l.b16 %v258
      %v297 = vunpack.c.l.b16 %v259
      %v298 = vunpack.c.l.b16 %v260
      %v299 = vunpack.c.l.b16 %v261
      %v300 = vunpack.c.l.b16 %v262
      %v301 = vunpack.c.l.b16 %v263
      %v302 = vunpack.c.l.b16 %v264
      %v303 = vunpack.c.l.b16 %v265
      %v304 = vunpack.c.l.b16 %v266
      %v305 = vunpack.c.l.b16 %v267
      %v306 = vunpack.c.l.b16 %v268
      %v307 = vunpack.c.l.b16 %v269
      %v308 = vunpack.c.l.b16 %v270
      %v309 = vunpack.c.l.b16 %v271
      %v310 = vunpack.c.l.b16 %v272
      %v311 = vunpack.c.l.b16 %v273
      %v312 = vpack.c.b16 %v297, %v296
      %v313 = vpack.c.b16 %v299, %v298
      %v314 = vpack.c.b16 %v301, %v300
      %v315 = vpack.c.b16 %v303, %v302
      %v316 = vpack.c.b16 %v305, %v304
      %v317 = vpack.c.b16 %v307, %v306
      %v318 = vpack.c.b16 %v309, %v308
      %v319 = vpack.c.b16 %v311, %v310
      %328 = vmatpush.bf16.msra.mxu0 %v319
      %329 = vmatpush.bf16.msra.mxu0 %v318
      %330 = vmatpush.bf16.msra.mxu0 %v317
      %331 = vmatpush.bf16.msra.mxu0 %v316
      %332 = vmatpush.bf16.msra.mxu0 %v315
      %333 = vmatpush.bf16.msra.mxu0 %v314
      %334 = vmatpush.bf16.msra.mxu0 %v313
      %335 = vmatpush.bf16.msra.mxu0 %v312
      %336 = vmatmul.bf16.gmra.mxu0 %v278
      %v337 = vpop.f32.mrf.mxu0
      %v338 = vadd.f32 0.0, %v337
      %v339 = vpop.f32.mrf.mxu0
      %v340 = vadd.f32 0.0, %v339
      %341 = vdwg.mxu0
      %v342 = vld [vmem:[%s4] sm:$0x1]
      %v344 = vperm.slane %v342, 0
      %v346 = vadd.f32 %v338, %v344
      %v347 = vadd.f32 %v340, %v344
      %v348 = vadd.f32 %v254, %v346
      %v349 = vadd.f32 %v255, %v347
      %v350 = vmax.f32 %v348, 0.0
      %v351 = vmax.f32 %v349, 0.0
      %352 = vst [vmem:[%s244] sm:$0xff] %v350
      %353 = vst [vmem:[%s244 + $0x8] sm:$0xff] %v351
      %p354 = scmp.lt.s32.totalorder %s16, 1
      %s355 = scalar_select %p354, %s16, 1
      %s356 = smul.addr %s355, 2
      %s357 = smul.addr %s356, 8
      %s358 = scalar_lea.vmem %s5, %s357
      // Predicated region
      $region41: #{residual_block.5} parent=39 // pred_check
        %p359 = pneg %p149
      $region42: #{residual_block.5} parent=39 // pred_check_branch
        %361 = sbr.rel (%p359) target = $region44
      $region43: #{residual_block.5} parent=39 // pred_region
        _
      $region44: #{residual_block.5} parent=39 // pred_fallthru
        _
    $region40: #{residual_block.5} parent=5 // pred_fallthru
      _
    %p362 = scmp.le.s32.totalorder 2, %s11
    // Predicated region
    $region45: #{residual_block.5} parent=5 // pred_check
      %p363 = pneg %p362
    $region46: #{residual_block.5} parent=5 // pred_check_branch
      %365 = sbr.rel (%p363) target = $region48
    $region47: #{residual_block.5} parent=5 // pred_region
      %s366 = ssub.s32 %s11, 2
      // Predicated region
      $region49: #{residual_block.5} parent=47 // pred_check
        %p367 = pneg %p155
      $region50: #{residual_block.5} parent=47 // pred_check_branch
        %369 = sbr.rel (%p367) target = $region52
      $region51: #{residual_block.5} parent=47 // pred_region
        %p370 = scmp.lt.s32.totalorder %s17, 1
        %s371 = scalar_select %p370, %s17, 1
        %s372 = smul.addr %s371, 2
        %s373 = smul.addr %s372, 8
        %s374 = scalar_lea.vmem %s5, %s373
      $region52: #{residual_block.5} parent=47 // pred_fallthru
        _
    $region48: #{residual_block.5} parent=5 // pred_fallthru
      _
  $region6: #{residual_block.5} parent=0 // loop_footer
    %s15 = sadd.s32 1, %s11
  $region7: #{residual_block.5} parent=0 // loop_footer_branch
    %10 = sbr.rel target = $region3
  $region8: #{residual_block.5} parent=0 // loop_exit
    _

// kernel: residual_block.4
$region0: #{residual_block.4}
  #allocation0 [shape = 'u32[]', space=smem, size = 0x4, offset = 0x4, fixed_abs, tag = 'smem constant byte address 0x4 - core index']
  #allocation1 [shape = 'u32[72,128]{1,0:T(1,128)}', space=vmem, size = 0x9000, scoped, tag = 'internal scratch']
  %s0 = inlined_call_operand.vmem [shape: bf16[2,16,128], index: 0, kind: input, shape index: {}]
  %s1 = inlined_call_operand.vmem [shape: f32[2,128], index: 1, kind: input, shape index: {}]
  %s2 = inlined_call_operand.vmem [shape: bf16[3,128,128], index: 2, kind: input, shape index: {}]
  %s3 = inlined_call_operand.vmem [shape: bf16[2,16,128], index: 3, kind: output, shape index: {0}]
  %s4 = inlined_call_operand.vmem [shape: f32[2,2,128], index: 4, kind: output, shape index: {1}]
  %5 = xla_tuple %s3, %s4
  %s6 = sld [smem:[#allocation0]]
  $region53: #{residual_block.4} parent=0
    _
  %s8 = ssub.s32 1, %s6
  %s9 = scalar_select 0, %s8, %s6
  loop: start=0, step=1, limit=4
  $region2: #{residual_block.4} parent=0 // loop_pre_header
    _
  $region3: #{residual_block.4} parent=0 // loop_header
    %s11 = sphi 0, %s15
    %p12 = scmp.ge.s32.totalorder %s11, 4
    %s21 = sphi 0, %s23
    %s24 = sphi 0, %s21
    %s25 = sphi 0, %s24
    %s41 = sphi 0, %s25
    %s45 = sphi 0, %s45
    %s47 = sphi 0, %s45
    %s48 = sphi 0, %s47
    %s62 = sphi 0, %s48
    %s66 = sphi 0, %s66
    %s68 = sphi 0, %s66
    %s69 = sphi 0, %s68
    %s83 = sphi 0, %s69
    %s89 = sphi 0, %s91
    %s92 = sphi 0, %s89
    %s93 = sphi 0, %s92
    %s109 = sphi 0, %s93
    %s115 = sphi 0, %s117
    %s118 = sphi 0, %s115
    %s119 = sphi 0, %s118
    %s135 = sphi 0, %s119
  $region4: #{residual_block.4} parent=0 // loop_header_branch
    %14 = sbr.rel (%p12) target = $region8
  $region5: #{residual_block.4} parent=0 // loop_body
    %s16 = ssub.s32 %s11, 1
    %s17 = ssub.s32 %s11, 2
    %s18 = sadd.s32 %s11, 1
    %s19 = ssub.s32 %s11, %s18
    %p20 = scmp.eq.s32.totalorder %s19, 0
    %s22 = sadd.s32 %s21, 1
    %s23 = scalar_select %p20, %s21, %s22
    %p26 = pneg %p20
    %p27 = scmp.eq.s32.totalorder %s11, 1
    %p28 = por %p26, %p27
    %p29 = scmp.ne.s32.totalorder %s21, %s24
    %p30 = scmp.eq.s32.totalorder %s11, 0
    %p31 = por %p29, %p30
    %p32 = scmp.ne.s32.totalorder %s21, %s24
    %p33 = scmp.eq.s32.totalorder %s16, 1
    %p34 = por %p32, %p33
    %p35 = scmp.ne.s32.totalorder %s24, %s25
    %p36 = scmp.eq.s32.totalorder %s16, 0
    %p37 = por %p35, %p36
    %p38 = scmp.ne.s32.totalorder %s24, %s25
    %p39 = scmp.eq.s32.totalorder %s17, 1
    %p40 = por %p38, %p39
    %p42 = scmp.ne.s32.totalorder %s25, %s41
    %p43 = scmp.eq.s32.totalorder %s17, 0
    %p44 = por %p42, %p43
    %s46 = sadd.s32 %s45, 1
    %p49 = scmp.eq.s32.totalorder %s11, 1
    %p50 = scmp.ne.s32.totalorder %s45, %s47
    %p51 = scmp.eq.s32.totalorder %s11, 0
    %p52 = por %p50, %p51
    %p53 = scmp.ne.s32.totalorder %s45, %s47
    %p54 = scmp.eq.s32.totalorder %s16, 1
    %p55 = por %p53, %p54
    %p56 = scmp.ne.s32.totalorder %s47, %s48
    %p57 = scmp.eq.s32.totalorder %s16, 0
    %p58 = por %p56, %p57
    %p59 = scmp.ne.s32.totalorder %s47, %s48
    %p60 = scmp.eq.s32.totalorder %s17, 1
    %p61 = por %p59, %p60
    %p63 = scmp.ne.s32.totalorder %s48, %s62
    %p64 = scmp.eq.s32.totalorder %s17, 0
    %p65 = por %p63, %p64
    %s67 = sadd.s32 %s66, 1
    %p70 = scmp.eq.s32.totalorder %s11, 1
    %p71 = scmp.ne.s32.totalorder %s66, %s68
    %p72 = scmp.eq.s32.totalorder %s11, 0
    %p73 = por %p71, %p72
    %p74 = scmp.ne.s32.totalorder %s66, %s68
    %p75 = scmp.eq.s32.totalorder %s16, 1
    %p76 = por %p74, %p75
    %p77 = scmp.ne.s32.totalorder %s68, %s69
    %p78 = scmp.eq.s32.totalorder %s16, 0
    %p79 = por %p77, %p78
    %p80 = scmp.ne.s32.totalorder %s68, %s69
    %p81 = scmp.eq.s32.totalorder %s17, 1
    %p82 = por %p80, %p81
    %p84 = scmp.ne.s32.totalorder %s69, %s83
    %p85 = scmp.eq.s32.totalorder %s17, 0
    %p86 = por %p84, %p85
    %s87 = ssub.s32 %s11, %s18
    %p88 = scmp.eq.s32.totalorder %s87, 0
    %s90 = sadd.s32 %s89, 1
    %s91 = scalar_select %p88, %s89, %s90
    %p94 = pneg %p88
    %p95 = scmp.eq.s32.totalorder %s11, 1
    %p96 = por %p94, %p95
    %p97 = scmp.ne.s32.totalorder %s89, %s92
    %p98 = scmp.eq.s32.totalorder %s11, 0
    %p99 = por %p97, %p98
    %p100 = scmp.ne.s32.totalorder %s89, %s92
    %p101 = scmp.eq.s32.totalorder %s16, 1
    %p102 = por %p100, %p101
    %p103 = scmp.ne.s32.totalorder %s92, %s93
    %p104 = scmp.eq.s32.totalorder %s16, 0
    %p105 = por %p103, %p104
    %p106 = scmp.ne.s32.totalorder %s92, %s93
    %p107 = scmp.eq.s32.totalorder %s17, 1
    %p108 = por %p106, %p107
    %p110 = scmp.ne.s32.totalorder %s93, %s109
    %p111 = scmp.eq.s32.totalorder %s17, 0
    %p112 = por %p110, %p111
    %s113 = ssub.s32 %s11, %s18
    %p114 = scmp.eq.s32.totalorder %s113, 0
    %s116 = sadd.s32 %s115, 1
    %s117 = scalar_select %p114, %s115, %s116
    %p120 = pneg %p114
    %p121 = scmp.eq.s32.totalorder %s11, 1
    %p122 = por %p120, %p121
    %p123 = scmp.ne.s32.totalorder %s115, %s118
    %p124 = scmp.eq.s32.totalorder %s11, 0
    %p125 = por %p123, %p124
    %p126 = scmp.ne.s32.totalorder %s115, %s118
    %p127 = scmp.eq.s32.totalorder %s16, 1
    %p128 = por %p126, %p127
    %p129 = scmp.ne.s32.totalorder %s118, %s119
    %p130 = scmp.eq.s32.totalorder %s16, 0
    %p131 = por %p129, %p130
    %p132 = scmp.ne.s32.totalorder %s118, %s119
    %p133 = scmp.eq.s32.totalorder %s17, 1
    %p134 = por %p132, %p133
    %p136 = scmp.ne.s32.totalorder %s119, %s135
    %p137 = scmp.eq.s32.totalorder %s17, 0
    %p138 = por %p136, %p137
    %p139 = scmp.le.s32.totalorder 1, %s11
    %p140 = scmp.lt.s32.totalorder %s11, 3
    %p141 = pnand %p139, %p140
    %p142 = pneg %p141
    // Predicated region
    $region9: #{residual_block.4} parent=5 // pred_check
      _
    $region10: #{residual_block.4} parent=5 // pred_check_branch
      %144 = sbr.rel (%p141) target = $region12
    $region11: #{residual_block.4} parent=5 // pred_region
      %s145 = ssub.s32 %s11, 1
      // Predicated region
      $region13: #{residual_block.4} parent=11 // pred_check
        %p146 = pneg %p58
      $region14: #{residual_block.4} parent=11 // pred_check_branch
        %148 = sbr.rel (%p146) target = $region16
      $region15: #{residual_block.4} parent=11 // pred_region
        _
      $region16: #{residual_block.4} parent=11 // pred_fallthru
        _
      // Predicated region
      $region17: #{residual_block.4} parent=11 // pred_check
        %p149 = pneg %p79
      $region18: #{residual_block.4} parent=11 // pred_check_branch
        %151 = sbr.rel (%p149) target = $region20
      $region19: #{residual_block.4} parent=11 // pred_region
        _
      $region20: #{residual_block.4} parent=11 // pred_fallthru
        _
    $region12: #{residual_block.4} parent=5 // pred_fallthru
      _
    %p152 = scmp.lt.s32.totalorder %s11, 2
    // Predicated region
    $region21: #{residual_block.4} parent=5 // pred_check
      %p153 = pneg %p152
    $region22: #{residual_block.4} parent=5 // pred_check_branch
      %155 = sbr.rel (%p153) target = $region24
    $region23: #{residual_block.4} parent=5 // pred_region
      // Predicated region
      $region25: #{residual_block.4} parent=23 // pred_check
        %p156 = pneg %p31
      $region26: #{residual_block.4} parent=23 // pred_check_branch
        %158 = sbr.rel (%p156) target = $region28
      $region27: #{residual_block.4} parent=23 // pred_region
        %p159 = scmp.lt.s32.totalorder %s11, 1
        %s160 = scalar_select %p159, %s11, 1
        %s161 = smul.addr %s160, 2
        %s162 = smul.addr %s161, 4
        %s163 = scalar_lea.vmem %s0, %s162
      $region28: #{residual_block.4} parent=23 // pred_fallthru
        _
    $region24: #{residual_block.4} parent=5 // pred_fallthru
      _
    %p164 = scmp.le.s32.totalorder 1, %s11
    %p165 = scmp.lt.s32.totalorder %s11, 3
    %p166 = pnand %p164, %p165
    %p167 = pneg %p166
    // Predicated region
    $region29: #{residual_block.4} parent=5 // pred_check
      _
    $region30: #{residual_block.4} parent=5 // pred_check_branch
      %169 = sbr.rel (%p166) target = $region32
    $region31: #{residual_block.4} parent=5 // pred_region
      %s170 = ssub.s32 %s11, 1
      %p171 = scmp.lt.s32.totalorder %s16, 1
      %s172 = scalar_select %p171, %s16, 1
      %s173 = smul.addr %s172, 2
      %s174 = smul.addr %s173, 4
      %s175 = scalar_lea.vmem %s0, %s174
      %p176 = pneg %p37
      %p177 = pneg %p34
      %p178 = pneg %p58
      %p179 = pneg %p55
      %p180 = pneg %p79
      %p181 = pneg %p76
      %p182 = pneg %p105
      %p183 = pneg %p102
      %p184 = scmp.lt.s32.totalorder %s16, 1
      %s185 = scalar_select %p184, %s16, 1
      %s186 = smul.addr %s185, 2
      %s187 = smul.addr %s186, 4
      %s188 = scalar_lea.vmem %s3, %s187
      %p189 = pneg %p131
      %p190 = pneg %p128
      %p191 = scmp.lt.s32.totalorder %s16, 1
      %s192 = scalar_select %p191, %s16, 1
      %s193 = smul.addr %s192, 2
      %s194 = scalar_lea.vmem %s4, %s193
      %p195 = scmp.lt.s32.totalorder %s16, 1
      %s196 = scalar_select %p195, %s16, 1
      %s197 = smul.addr %s196, 2
      %s198 = smul.addr %s197, 4
      %s199 = scalar_lea.vmem %s0, %s198
      %p200 = scmp.lt.s32.totalorder %s16, 1
      %s201 = scalar_select %p200, %s16, 1
      %s202 = smul.addr %s201, 2
      %s203 = smul.addr %s202, 4
      %s204 = scalar_lea.vmem %s3, %s203
      %p205 = scmp.lt.s32.totalorder %s16, 1
      %s206 = scalar_select %p205, %s16, 1
      %s207 = smul.addr %s206, 2
      %s208 = scalar_lea.vmem %s4, %s207
      %v210 = vld [vmem:[%s1] sm:$0x3]
      %v211 = vld [vmem:[%s199] sm:$0xf]
      %v212 = vld [vmem:[%s199 + $0x4] sm:$0xf]
      %v213 = vunpack.c.l.bf16 %v211
      %v214 = vunpack.c.l.bf16 %v212
      %v215 = vperm.slane %v210, 0
      %v216 = vmul.f32 %v213, %v215
      %v217 = vmul.f32 %v214, %v215
      %v218 = vperm.slane %v210, 1
      %v219 = vadd.f32 %v216, %v218
      %v220 = vadd.f32 %v217, %v218
      %v221 = vmax.f32 %v219, 0.0
      %v222 = vmax.f32 %v220, 0.0
      %v223 = vpack.c.bf16 %v221, %v221
      %v224 = vpack.c.bf16 %v222, %v222
      %v227 = vunpack.c.l.b16 %v223
      %v228 = vunpack.c.l.b16 %v224
      %v229 = vpack.c.b16 %v228, %v227
      %v231 = vshrl.u32 %v229, 16
      %v233 = vrot.slane %v231, 7
      %v234 = vshll.u32 %v229, 16
      %v236 = vor.u32 %v233, %v234
      %vm238 = vcmask 1040384
      %vm239 = vsmask.f32 256
      %vm240 = vmand %vm238, %vm239
      %v241 = vsel %vm240, 0, %v236
      %v242 = vrot.slane %v234, 1
      %v243 = vor.u32 %v231, %v242
      %vm245 = vcmask 1047552
      %vm246 = vsmask.f32 7424
      %vm247 = vmand %vm245, %vm246
      %v248 = vsel %vm247, %v243, 0
      %v249 = vld [vmem:[%s2] sm:$0xf]
      %v250 = vld [vmem:[%s2 + $0x4] sm:$0xf]
      %v251 = vld [vmem:[%s2 + $0x8] sm:$0xf]
      %v252 = vld [vmem:[%s2 + $0xc] sm:$0xf]
      %v253 = vld [vmem:[%s2 + $0x10] sm:$0xf]
      %v254 = vld [vmem:[%s2 + $0x14] sm:$0xf]
      %v255 = vld [vmem:[%s2 + $0x18] sm:$0xf]
      %v256 = vld [vmem:[%s2 + $0x1c] sm:$0xf]
      %v257 = vld [vmem:[%s2 + $0x20] sm:$0xf]
      %v258 = vld [vmem:[%s2 + $0x24] sm:$0xf]
      %v259 = vld [vmem:[%s2 + $0x28] sm:$0xf]
      %v260 = vld [vmem:[%s2 + $0x2c] sm:$0xf]
      %v261 = vld [vmem:[%s2 + $0x30] sm:$0xf]
      %v262 = vld [vmem:[%s2 + $0x34] sm:$0xf]
      %v263 = vld [vmem:[%s2 + $0x38] sm:$0xf]
      %v264 = vld [vmem:[%s2 + $0x3c] sm:$0xf]
      %s265 = scalar_lea.vmem %s2, 64
      %v266 = vld [vmem:[%s265] sm:$0xf]
      %v267 = vld [vmem:[%s265 + $0x4] sm:$0xf]
      %v268 = vld [vmem:[%s265 + $0x8] sm:$0xf]
      %v269 = vld [vmem:[%s265 + $0xc] sm:$0xf]
      %v270 = vld [vmem:[%s265 + $0x10] sm:$0xf]
      %v271 = vld [vmem:[%s265 + $0x14] sm:$0xf]
      %v272 = vld [vmem:[%s265 + $0x18] sm:$0xf]
      %v273 = vld [vmem:[%s265 + $0x1c] sm:$0xf]
      %v274 = vld [vmem:[%s265 + $0x20] sm:$0xf]
      %v275 = vld [vmem:[%s265 + $0x24] sm:$0xf]
      %v276 = vld [vmem:[%s265 + $0x28] sm:$0xf]
      %v277 = vld [vmem:[%s265 + $0x2c] sm:$0xf]
      %v278 = vld [vmem:[%s265 + $0x30] sm:$0xf]
      %v279 = vld [vmem:[%s265 + $0x34] sm:$0xf]
      %v280 = vld [vmem:[%s265 + $0x38] sm:$0xf]
      %v281 = vld [vmem:[%s265 + $0x3c] sm:$0xf]
      %v299 = vunpack.c.l.b16 %v266
      %v300 = vunpack.c.l.b16 %v267
      %v301 = vunpack.c.l.b16 %v268
      %v302 = vunpack.c.l.b16 %v269
      %v303 = vunpack.c.l.b16 %v270
      %v304 = vunpack.c.l.b16 %v271
      %v305 = vunpack.c.l.b16 %v272
      %v306 = vunpack.c.l.b16 %v273
      %v307 = vunpack.c.l.b16 %v274
      %v308 = vunpack.c.l.b16 %v275
      %v309 = vunpack.c.l.b16 %v276
      %v310 = vunpack.c.l.b16 %v277
      %v311 = vunpack.c.l.b16 %v278
      %v312 = vunpack.c.l.b16 %v279
      %v313 = vunpack.c.l.b16 %v280
      %v314 = vunpack.c.l.b16 %v281
      %v315 = vpack.c.b16 %v300, %v299
      %v316 = vpack.c.b16 %v302, %v301
      %v317 = vpack.c.b16 %v304, %v303
      %v318 = vpack.c.b16 %v306, %v305
      %v319 = vpack.c.b16 %v308, %v307
      %v320 = vpack.c.b16 %v310, %v309
      %v321 = vpack.c.b16 %v312, %v311
      %v322 = vpack.c.b16 %v314, %v313
      %331 = vmatpush.bf16.msra.mxu0 %v322
      %332 = vmatpush.bf16.msra.mxu0 %v321
      %333 = vmatpush.bf16.msra.mxu0 %v320
      %334 = vmatpush.bf16.msra.mxu0 %v319
      %335 = vmatpush.bf16.msra.mxu0 %v318
      %336 = vmatpush.bf16.msra.mxu0 %v317
      %337 = vmatpush.bf16.msra.mxu0 %v316
      %338 = vmatpush.bf16.msra.mxu0 %v315
      %339 = vmatmul.bf16.gmra.mxu0 %v229
      %v340 = vpop.f32.mrf.mxu0
      %v341 = vadd.f32 0.0, %v340
      %v342 = vpop.f32.mrf.mxu0
      %v343 = vadd.f32 0.0, %v342
      %344 = vdwg.mxu0
      %v361 = vunpack.c.l.b16 %v249
      %v362 = vunpack.c.l.b16 %v250
      %v363 = vunpack.c.l.b16 %v251
      %v364 = vunpack.c.l.b16 %v252
      %v365 = vunpack.c.l.b16 %v253
      %v366 = vunpack.c.l.b16 %v254
      %v367 = vunpack.c.l.b16 %v255
      %v368 = vunpack.c.l.b16 %v256
      %v369 = vunpack.c.l.b16 %v257
      %v370 = vunpack.c.l.b16 %v258
      %v371 = vunpack.c.l.b16 %v259
      %v372 = vunpack.c.l.b16 %v260
      %v373 = vunpack.c.l.b16 %v261
      %v374 = vunpack.c.l.b16 %v262
      %v375 = vunpack.c.l.b16 %v263
      %v376 = vunpack.c.l.b16 %v264
      %v377 = vpack.c.b16 %v362, %v361
      %v378 = vpack.c.b16 %v364, %v363
      %v379 = vpack.c.b16 %v366, %v365
      %v380 = vpack.c.b16 %v368, %v367
      %v381 = vpack.c.b16 %v370, %v369
      %v382 = vpack.c.b16 %v372, %v371
      %v383 = vpack.c.b16 %v374, %v373
      %v384 = vpack.c.b16 %v376, %v375
      %393 = vmatpush.bf16.msra.mxu0 %v384
      %394 = vmatpush.bf16.msra.mxu0 %v383
      %395 = vmatpush.bf16.msra.mxu0 %v382
      %396 = vmatpush.bf16.msra.mxu0 %v381
      %397 = vmatpush.bf16.msra.mxu0 %v380
      %398 = vmatpush.bf16.msra.mxu0 %v379
      %399 = vmatpush.bf16.msra.mxu0 %v378
      %400 = vmatpush.bf16.msra.mxu0 %v377
      %401 = vmatmul.bf16.gmra.mxu0 %v241
      %v402 = vpop.f32.mrf.mxu0
      %v403 = vadd.f32 %v341, %v402
      %v404 = vpop.f32.mrf.mxu0
      %v405 = vadd.f32 %v343, %v404
      %406 = vdwg.mxu0
      %s407 = scalar_lea.vmem %s2, 128
      %v408 = vld [vmem:[%s407] sm:$0xf]
      %v409 = vld [vmem:[%s407 + $0x4] sm:$0xf]
      %v410 = vld [vmem:[%s407 + $0x8] sm:$0xf]
      %v411 = vld [vmem:[%s407 + $0xc] sm:$0xf]
      %v412 = vld [vmem:[%s407 + $0x10] sm:$0xf]
      %v413 = vld [vmem:[%s407 + $0x14] sm:$0xf]
      %v414 = vld [vmem:[%s407 + $0x18] sm:$0xf]
      %v415 = vld [vmem:[%s407 + $0x1c] sm:$0xf]
      %v416 = vld [vmem:[%s407 + $0x20] sm:$0xf]
      %v417 = vld [vmem:[%s407 + $0x24] sm:$0xf]
      %v418 = vld [vmem:[%s407 + $0x28] sm:$0xf]
      %v419 = vld [vmem:[%s407 + $0x2c] sm:$0xf]
      %v420 = vld [vmem:[%s407 + $0x30] sm:$0xf]
      %v421 = vld [vmem:[%s407 + $0x34] sm:$0xf]
      %v422 = vld [vmem:[%s407 + $0x38] sm:$0xf]
      %v423 = vld [vmem:[%s407 + $0x3c] sm:$0xf]
      %v440 = vunpack.c.l.b16 %v408
      %v441 = vunpack.c.l.b16 %v409
      %v442 = vunpack.c.l.b16 %v410
      %v443 = vunpack.c.l.b16 %v411
      %v444 = vunpack.c.l.b16 %v412
      %v445 = vunpack.c.l.b16 %v413
      %v446 = vunpack.c.l.b16 %v414
      %v447 = vunpack.c.l.b16 %v415
      %v448 = vunpack.c.l.b16 %v416
      %v449 = vunpack.c.l.b16 %v417
      %v450 = vunpack.c.l.b16 %v418
      %v451 = vunpack.c.l.b16 %v419
      %v452 = vunpack.c.l.b16 %v420
      %v453 = vunpack.c.l.b16 %v421
      %v454 = vunpack.c.l.b16 %v422
      %v455 = vunpack.c.l.b16 %v423
      %v456 = vpack.c.b16 %v441, %v440
      %v457 = vpack.c.b16 %v443, %v442
      %v458 = vpack.c.b16 %v445, %v444
      %v459 = vpack.c.b16 %v447, %v446
      %v460 = vpack.c.b16 %v449, %v448
      %v461 = vpack.c.b16 %v451, %v450
      %v462 = vpack.c.b16 %v453, %v452
      %v463 = vpack.c.b16 %v455, %v454
      %472 = vmatpush.bf16.msra.mxu0 %v463
      %473 = vmatpush.bf16.msra.mxu0 %v462
      %474 = vmatpush.bf16.msra.mxu0 %v461
      %475 = vmatpush.bf16.msra.mxu0 %v460
      %476 = vmatpush.bf16.msra.mxu0 %v459
      %477 = vmatpush.bf16.msra.mxu0 %v458
      %478 = vmatpush.bf16.msra.mxu0 %v457
      %479 = vmatpush.bf16.msra.mxu0 %v456
      %480 = vmatmul.bf16.gmra.mxu0 %v248
      %v481 = vpop.f32.mrf.mxu0
      %v482 = vadd.f32 0.0, %v481
      %v483 = vpop.f32.mrf.mxu0
      %v484 = vadd.f32 0.0, %v483
      %485 = vdwg.mxu0
      %v486 = vadd.f32 %v403, %v482
      %v487 = vadd.f32 %v405, %v484
      %v488 = vadd.f32 %v486, %v487
      %v489 = vrot.slane %v488, 4
      %v490 = vadd.f32 %v488, %v489
      %v491 = vrot.slane %v490, 2
      %v492 = vadd.f32 %v490, %v491
      %v493 = vrot.slane %v492, 1
      %v494 = vadd.f32 %v492, %v493
      %v495 = vmul.f32 %v486, %v486
      %v496 = vmul.f32 %v487, %v487
      %v497 = vadd.f32 %v495, %v496
      %v498 = vrot.slane %v497, 4
      %v499 = vadd.f32 %v497, %v498
      %v500 = vrot.slane %v499, 2
      %v501 = vadd.f32 %v499, %v500
      %v502 = vrot.slane %v501, 1
      %v503 = vadd.f32 %v501, %v502
      %vm504 = vcmask 1040384
      %v505 = vsel %vm504, %v494, %v503
      %506 = vst [vmem:[%s208] sm:$0x3] %v505
      %v507 = vpack.c.bf16 %v486, %v486
      %v508 = vpack.c.bf16 %v487, %v487
      %509 = vst [vmem:[%s204] sm:$0xf] %v507
      %510 = vst [vmem:[%s204 + $0x4] sm:$0xf] %v508
      %p511 = scmp.lt.s32.totalorder %s16, 1
      %s512 = scalar_select %p511, %s16, 1
      %s513 = smul.addr %s512, 2
      %s514 = smul.addr %s513, 4
      %s515 = scalar_lea.vmem %s3, %s514
      %p516 = scmp.lt.s32.totalorder %s16, 1
      %s517 = scalar_select %p516, %s16, 1
      %s518 = smul.addr %s517, 2
      %s519 = scalar_lea.vmem %s4, %s518
      // Predicated region
      $region33: #{residual_block.4} parent=31 // pred_check
        %p520 = pneg %p102
      $region34: #{residual_block.4} parent=31 // pred_check_branch
        %522 = sbr.rel (%p520) target = $region36
      $region35: #{residual_block.4} parent=31 // pred_region
        _
      $region36: #{residual_block.4} parent=31 // pred_fallthru
        _
      // Predicated region
      $region37: #{residual_block.4} parent=31 // pred_check
        %p523 = pneg %p128
      $region38: #{residual_block.4} parent=31 // pred_check_branch
        %525 = sbr.rel (%p523) target = $region40
      $region39: #{residual_block.4} parent=31 // pred_region
        _
      $region40: #{residual_block.4} parent=31 // pred_fallthru
        _
    $region32: #{residual_block.4} parent=5 // pred_fallthru
      _
    %p526 = scmp.le.s32.totalorder 2, %s11
    // Predicated region
    $region41: #{residual_block.4} parent=5 // pred_check
      %p527 = pneg %p526
    $region42: #{residual_block.4} parent=5 // pred_check_branch
      %529 = sbr.rel (%p527) target = $region44
    $region43: #{residual_block.4} parent=5 // pred_region
      %s530 = ssub.s32 %s11, 2
      // Predicated region
      $region45: #{residual_block.4} parent=43 // pred_check
        %p531 = pneg %p108
      $region46: #{residual_block.4} parent=43 // pred_check_branch
        %533 = sbr.rel (%p531) target = $region48
      $region47: #{residual_block.4} parent=43 // pred_region
        %p534 = scmp.lt.s32.totalorder %s17, 1
        %s535 = scalar_select %p534, %s17, 1
        %s536 = smul.addr %s535, 2
        %s537 = smul.addr %s536, 4
        %s538 = scalar_lea.vmem %s3, %s537
      $region48: #{residual_block.4} parent=43 // pred_fallthru
        _
      // Predicated region
      $region49: #{residual_block.4} parent=43 // pred_check
        %p539 = pneg %p134
      $region50: #{residual_block.4} parent=43 // pred_check_branch
        %541 = sbr.rel (%p539) target = $region52
      $region51: #{residual_block.4} parent=43 // pred_region
        %p542 = scmp.lt.s32.totalorder %s17, 1
        %s543 = scalar_select %p542, %s17, 1
        %s544 = smul.addr %s543, 2
        %s545 = scalar_lea.vmem %s4, %s544
      $region52: #{residual_block.4} parent=43 // pred_fallthru
        _
    $region44: #{residual_block.4} parent=5 // pred_fallthru
      _
  $region6: #{residual_block.4} parent=0 // loop_footer
    %s15 = sadd.s32 1, %s11
  $region7: #{residual_block.4} parent=0 // loop_footer_branch
    %10 = sbr.rel target = $region3
  $region8: #{residual_block.4} parent=0 // loop_exit
    _

</llo_original>
